<compile_context>
chip_gen: v7x
topology: tpu7x:2x2x1
jax: 0.10.0
libtpu: 0.0.40
codegen_flags: <defaults>
</compile_context>

<pallas_src>
import functools

import jax
import jax.numpy as jnp
from jax.experimental import pallas as pl
from jax.experimental.pallas import tpu as pltpu


def _gates_to_hc(gates, c, hidden):
    """gates: (bb, 4H) f32 in PyTorch order [i, f, g, o] -> new (h, c) in f32."""
    i = jax.nn.sigmoid(gates[:, 0 * hidden:1 * hidden])
    f = jax.nn.sigmoid(gates[:, 1 * hidden:2 * hidden])
    g = jnp.tanh(gates[:, 2 * hidden:3 * hidden])
    o = jax.nn.sigmoid(gates[:, 3 * hidden:4 * hidden])
    c_new = f * c + i * g
    h_new = o * jnp.tanh(c_new)
    return h_new, c_new


def fact_encoder_kernel(xf_ref, xb_ref, lens_ref,
                        w_f_ref, b_f_ref, w_b_ref, b_b_ref,
                        out_ref,
                        h_f, c_f, h_b, c_b, acc_f, acc_b,
                        *, hidden, tt, t_pad):
    tc = pl.program_id(1)            # time-chunk index (sequential axis)
    nt = pl.num_programs(1)

    @pl.when(tc == 0)
    def _():
        h_f[...] = jnp.zeros_like(h_f)
        c_f[...] = jnp.zeros_like(c_f)
        h_b[...] = jnp.zeros_like(h_b)
        c_b[...] = jnp.zeros_like(c_b)
        acc_f[...] = jnp.zeros_like(acc_f)
        acc_b[...] = jnp.zeros_like(acc_b)

    lens = lens_ref[...]             # (bb, 1) int32
    w_f = w_f_ref[...]               # (D+H, 4H) bf16 (fused [W_ih; W_hh])
    w_b = w_b_ref[...]
    b_f = b_f_ref[...]               # (1, 4H) f32
    b_b = b_b_ref[...]
    cdt = w_f.dtype                  # bf16 matmul operands, f32 accumulation

    def step(s, carry):
        hf, cf, hb, cb, af, ab = carry
        t = tc * tt + s              # forward position == reversed-scan index

        # ---------------- forward direction ----------------
        x_f = xf_ref[s]              # (bb, D)
        zf = jnp.concatenate([x_f, hf.astype(cdt)], axis=1)
        gf = jnp.dot(zf, w_f, preferred_element_type=jnp.float32) + b_f
        hf, cf = _gates_to_hc(gf, cf, hidden)
        # past-length forward steps keep updating h/c (harmless) but are not
        # accumulated — identical to the padded/packed reference.
        m_f = (lens > t).astype(jnp.float32)                    # (bb, 1)
        af = af + m_f * hf

        # --------------- backward direction -----------------
        # This chunk was fetched with a reversed index_map, so local index
        # tt-1-s is the original position  pos_b = t_pad - 1 - t.
        x_b = xb_ref[tt - 1 - s]     # (bb, D)
        zb = jnp.concatenate([x_b, hb.astype(cdt)], axis=1)
        gb = jnp.dot(zb, w_b, preferred_element_type=jnp.float32) + b_b
        hb_new, cb_new = _gates_to_hc(gb, cb, hidden)
        pos_b = t_pad - 1 - t
        m_b = (lens > pos_b).astype(jnp.float32)                # (bb, 1)
        # Per-row mask keeps the backward state frozen at zero until the first
        # valid token of each row (pack_padded_sequence semantics).
        hb = m_b * hb_new + (1.0 - m_b) * hb
        cb = m_b * cb_new + (1.0 - m_b) * cb
        ab = ab + m_b * hb_new
        return hf, cf, hb, cb, af, ab

    carry = (h_f[...], c_f[...], h_b[...], c_b[...], acc_f[...], acc_b[...])
    carry = jax.lax.fori_loop(0, tt, step, carry, unroll=True)
    h_f[...], c_f[...], h_b[...], c_b[...], acc_f[...], acc_b[...] = carry

    @pl.when(tc == nt - 1)
    def _():
        # Single lane-dense store of the full (bb, 2H) output block.
        out_ref[...] = jnp.concatenate([acc_f[...], acc_b[...]], axis=1)


def fact_encoder(facts, fact_lens, params, hidden, *,
                 time_chunk=8, batch_block=None, compute_dtype=jnp.bfloat16):
    """facts: (B, T, D) float32, fact_lens: (B,) int -> (B, 2*hidden) float32."""
    B, T, D = facts.shape
    H = hidden
    wih_f, whh_f, b_f, wih_b, whh_b, b_b = params

    # Fuse input + recurrent weights; cast matmul operands to bf16.
    w_f = jnp.concatenate([wih_f, whh_f], axis=0).astype(compute_dtype)  # (D+H, 4H)
    w_b = jnp.concatenate([wih_b, whh_b], axis=0).astype(compute_dtype)
    b_f = b_f.astype(jnp.float32)
    b_b = b_b.astype(jnp.float32)

    # Time chunking: pad T to a multiple of the chunk (padding is masked out).
    tt = max(1, min(time_chunk, T))
    t_pad = ((T + tt - 1) // tt) * tt
    if t_pad != T:
        facts = jnp.pad(facts, ((0, 0), (0, t_pad - T), (0, 0)))
    x_tm = jnp.transpose(facts, (1, 0, 2)).astype(compute_dtype)  # (T_pad, B, D)

    # Batch blocking: split batch across TensorCores (v7x) when large enough.
    if batch_block is None:
        batch_block = B // 2 if (B % 16 == 0) else B
    bb = batch_block
    assert B % bb == 0
    nb, nt = B // bb, t_pad // tt

    lens2d = fact_lens.astype(jnp.int32)[:, None]                 # (B, 1)

    def const(shape):
        return pl.BlockSpec(shape, lambda b, t: (0,) * len(shape))

    kernel = functools.partial(fact_encoder_kernel, hidden=H, tt=tt, t_pad=t_pad)

    return pl.pallas_call(
        kernel,
        out_shape=jax.ShapeDtypeStruct((B, 2 * H), jnp.float32),
        grid=(nb, nt),
        in_specs=[
            # forward stream: chunk t of the time-major activations
            pl.BlockSpec((tt, bb, D), lambda b, t: (t, b, 0)),
            # backward stream: SAME array, chunks read in reverse order
            pl.BlockSpec((tt, bb, D), lambda b, t: (nt - 1 - t, b, 0)),
            pl.BlockSpec((bb, 1), lambda b, t: (b, 0)),           # lengths
            const((D + H, 4 * H)), const((1, 4 * H)),             # fwd weight/bias
            const((D + H, 4 * H)), const((1, 4 * H)),             # bwd weight/bias
        ],
        out_specs=pl.BlockSpec((bb, 2 * H), lambda b, t: (b, 0)),
        scratch_shapes=[pltpu.VMEM((bb, H), jnp.float32) for _ in range(6)],
        compiler_params=pltpu.CompilerParams(
            dimension_semantics=("parallel", "arbitrary"),
            vmem_limit_bytes=32 * 1024 * 1024,
        ),
    )(x_tm, x_tm, lens2d, w_f, b_f, w_b, b_b)


# ---------------- pure-JAX reference (emulates the PyTorch module) ------------
def _lstm_scan(x_seq, w_ih, w_hh, b, hidden):
    B = x_seq.shape[0]

    def step(carry, x_t):
        h, c = carry
        gates = x_t @ w_ih + h @ w_hh + b
        i = jax.nn.sigmoid(gates[:, :hidden])
        f = jax.nn.sigmoid(gates[:, hidden:2 * hidden])
        g = jnp.tanh(gates[:, 2 * hidden:3 * hidden])
        o = jax.nn.sigmoid(gates[:, 3 * hidden:4 * hidden])
        c = f * c + i * g
        h = o * jnp.tanh(c)
        return (h, c), h

    h0 = jnp.zeros((B, hidden), jnp.float32)
    c0 = jnp.zeros((B, hidden), jnp.float32)
    _, hs = jax.lax.scan(step, (h0, c0), jnp.transpose(x_seq, (1, 0, 2)))
    return jnp.transpose(hs, (1, 0, 2))  # (B, T, H)


def fact_encoder_ref(facts, fact_lens, params, hidden):
    wih_f, whh_f, b_f, wih_b, whh_b, b_b = params
    B, T, D = facts.shape
    idx = jnp.clip(fact_lens[:, None] - 1 - jnp.arange(T)[None, :], 0, T - 1)
    facts_rev = jnp.take_along_axis(facts, idx[:, :, None], axis=1)
    mask = (jnp.arange(T)[None, :] < fact_lens[:, None]).astype(jnp.float32)[:, :, None]
    hf = _lstm_scan(facts, wih_f, whh_f, b_f[0], hidden)
    hb = _lstm_scan(facts_rev, wih_b, whh_b, b_b[0], hidden)
    return jnp.concatenate([jnp.sum(hf * mask, 1), jnp.sum(hb * mask, 1)], axis=-1)


def init_params(key, d_model, hidden):
    bound = 1.0 / jnp.sqrt(hidden)
    ks = jax.random.split(key, 8)

    def u(k, shape):
        return jax.random.uniform(k, shape, jnp.float32, -bound, bound)

    # forward direction
    wih_f = u(ks[0], (d_model, 4 * hidden))
    whh_f = u(ks[1], (hidden, 4 * hidden))
    b_f = (u(ks[2], (1, 4 * hidden)) + u(ks[3], (1, 4 * hidden)))  # b_ih + b_hh
    # backward direction
    wih_b = u(ks[4], (d_model, 4 * hidden))
    whh_b = u(ks[5], (hidden, 4 * hidden))
    b_b = (u(ks[6], (1, 4 * hidden)) + u(ks[7], (1, 4 * hidden)))
    return (wih_f, whh_f, b_f, wih_b, whh_b, b_b)


if __name__ == "__main__":
    B, T, D, H = 2, 8, 32, 32   # batch, batch_max_len, d_model, hidden_size
    key = jax.random.PRNGKey(0)
    k_x, k_p = jax.random.split(key)

    facts = jax.random.normal(k_x, (B, T, D), jnp.float32)
    fact_lens = jnp.array([8, 5], jnp.int32)
    params = init_params(k_p, D, H)

    out = fact_encoder(facts, fact_lens, params, H)
    jax.block_until_ready(out)

    ref = fact_encoder_ref(facts, fact_lens, params, H)
    assert out.shape == (B, 2 * H)
    # bf16 matmul operands (with f32 accumulation and f32 gate math) -> looser
    # tolerance than the pure-f32 reference; real bugs would be O(0.3+) off.
    assert jnp.allclose(out, ref, atol=5e-2, rtol=5e-2), "mismatch vs reference"
    print("KERNEL_OK")
</pallas_src>

<mosaic_0001>
module attributes {stable_mosaic.version = 11 : i64} {
  func.func @fact_encoder_kernel(%arg0: i32, %arg1: i32, %arg2: memref<8x2x32xbf16, #tpu.memory_space<vmem>>, %arg3: memref<8x2x32xbf16, #tpu.memory_space<vmem>>, %arg4: memref<2x1xi32, #tpu.memory_space<vmem>>, %arg5: memref<64x128xbf16, #tpu.memory_space<vmem>>, %arg6: memref<1x128xf32, #tpu.memory_space<vmem>>, %arg7: memref<64x128xbf16, #tpu.memory_space<vmem>>, %arg8: memref<1x128xf32, #tpu.memory_space<vmem>>, %arg9: memref<2x64xf32, #tpu.memory_space<vmem>>, %arg10: memref<2x32xf32, #tpu.memory_space<vmem>>, %arg11: memref<2x32xf32, #tpu.memory_space<vmem>>, %arg12: memref<2x32xf32, #tpu.memory_space<vmem>>, %arg13: memref<2x32xf32, #tpu.memory_space<vmem>>, %arg14: memref<2x32xf32, #tpu.memory_space<vmem>>, %arg15: memref<2x32xf32, #tpu.memory_space<vmem>>) attributes {dimension_semantics = [#tpu.dimension_semantics<parallel>, #tpu.dimension_semantics<arbitrary>], iteration_bounds = array<i64: 1, 1>, scalar_prefetch = 0 : i64, scratch_operands = 6 : i64, tpu.core_type = #tpu.core_type<tc>, window_params = [{transform_indices = @transform_0, window_bounds = array<i64: 8, 2, 32>}, {transform_indices = @transform_1, window_bounds = array<i64: 8, 2, 32>}, {transform_indices = @transform_2, window_bounds = array<i64: 2, 1>}, {pipeline_mode = #tpu.pipeline_mode<synchronous>, transform_indices = @transform_3, window_bounds = array<i64: 64, 128>}, {pipeline_mode = #tpu.pipeline_mode<synchronous>, transform_indices = @transform_4, window_bounds = array<i64: 1, 128>}, {pipeline_mode = #tpu.pipeline_mode<synchronous>, transform_indices = @transform_5, window_bounds = array<i64: 64, 128>}, {pipeline_mode = #tpu.pipeline_mode<synchronous>, transform_indices = @transform_6, window_bounds = array<i64: 1, 128>}, {transform_indices = @transform_7, window_bounds = array<i64: 2, 64>}]} {
    %c0_i32 = arith.constant 0 : i32
    %0 = arith.cmpi eq, %arg1, %c0_i32 : i32
    %1 = arith.extui %0 : i1 to i32
    %c0_i32_0 = arith.constant 0 : i32
    %2 = arith.cmpi ne, %1, %c0_i32_0 : i32
    scf.if %2 {
      %cst_172 = arith.constant 0.000000e+00 : f32
      %807 = vector.broadcast %cst_172 : f32 to vector<2x32xf32>
      %c0_173 = arith.constant 0 : index
      %c0_174 = arith.constant 0 : index
      %808 = vector.load %arg10[%c0_173, %c0_174] : memref<2x32xf32, #tpu.memory_space<vmem>>, vector<2x32xf32>
      tpu.vector_store %arg10[%c0_173, %c0_174], %807 {strides = array<i32>} : memref<2x32xf32, #tpu.memory_space<vmem>>, vector<2x32xf32>,
      %cst_175 = arith.constant 0.000000e+00 : f32
      %809 = vector.broadcast %cst_175 : f32 to vector<2x32xf32>
      %c0_176 = arith.constant 0 : index
      %c0_177 = arith.constant 0 : index
      %810 = vector.load %arg11[%c0_176, %c0_177] : memref<2x32xf32, #tpu.memory_space<vmem>>, vector<2x32xf32>
      tpu.vector_store %arg11[%c0_176, %c0_177], %809 {strides = array<i32>} : memref<2x32xf32, #tpu.memory_space<vmem>>, vector<2x32xf32>,
      %cst_178 = arith.constant 0.000000e+00 : f32
      %811 = vector.broadcast %cst_178 : f32 to vector<2x32xf32>
      %c0_179 = arith.constant 0 : index
      %c0_180 = arith.constant 0 : index
      %812 = vector.load %arg12[%c0_179, %c0_180] : memref<2x32xf32, #tpu.memory_space<vmem>>, vector<2x32xf32>
      tpu.vector_store %arg12[%c0_179, %c0_180], %811 {strides = array<i32>} : memref<2x32xf32, #tpu.memory_space<vmem>>, vector<2x32xf32>,
      %cst_181 = arith.constant 0.000000e+00 : f32
      %813 = vector.broadcast %cst_181 : f32 to vector<2x32xf32>
      %c0_182 = arith.constant 0 : index
      %c0_183 = arith.constant 0 : index
      %814 = vector.load %arg13[%c0_182, %c0_183] : memref<2x32xf32, #tpu.memory_space<vmem>>, vector<2x32xf32>
      tpu.vector_store %arg13[%c0_182, %c0_183], %813 {strides = array<i32>} : memref<2x32xf32, #tpu.memory_space<vmem>>, vector<2x32xf32>,
      %cst_184 = arith.constant 0.000000e+00 : f32
      %815 = vector.broadcast %cst_184 : f32 to vector<2x32xf32>
      %c0_185 = arith.constant 0 : index
      %c0_186 = arith.constant 0 : index
      %816 = vector.load %arg14[%c0_185, %c0_186] : memref<2x32xf32, #tpu.memory_space<vmem>>, vector<2x32xf32>
      tpu.vector_store %arg14[%c0_185, %c0_186], %815 {strides = array<i32>} : memref<2x32xf32, #tpu.memory_space<vmem>>, vector<2x32xf32>,
      %cst_187 = arith.constant 0.000000e+00 : f32
      %817 = vector.broadcast %cst_187 : f32 to vector<2x32xf32>
      %c0_188 = arith.constant 0 : index
      %c0_189 = arith.constant 0 : index
      %818 = vector.load %arg15[%c0_188, %c0_189] : memref<2x32xf32, #tpu.memory_space<vmem>>, vector<2x32xf32>
      tpu.vector_store %arg15[%c0_188, %c0_189], %817 {strides = array<i32>} : memref<2x32xf32, #tpu.memory_space<vmem>>, vector<2x32xf32>,
    } else {
    }
    %c0 = arith.constant 0 : index
    %c0_1 = arith.constant 0 : index
    %3 = vector.load %arg4[%c0, %c0_1] : memref<2x1xi32, #tpu.memory_space<vmem>>, vector<2x1xi32>
    %c0_2 = arith.constant 0 : index
    %c0_3 = arith.constant 0 : index
    %4 = vector.load %arg5[%c0_2, %c0_3] : memref<64x128xbf16, #tpu.memory_space<vmem>>, vector<64x128xbf16>
    %c0_4 = arith.constant 0 : index
    %c0_5 = arith.constant 0 : index
    %5 = vector.load %arg7[%c0_4, %c0_5] : memref<64x128xbf16, #tpu.memory_space<vmem>>, vector<64x128xbf16>
    %c0_6 = arith.constant 0 : index
    %c0_7 = arith.constant 0 : index
    %6 = vector.load %arg6[%c0_6, %c0_7] : memref<1x128xf32, #tpu.memory_space<vmem>>, vector<1x128xf32>
    %c0_8 = arith.constant 0 : index
    %c0_9 = arith.constant 0 : index
    %7 = vector.load %arg8[%c0_8, %c0_9] : memref<1x128xf32, #tpu.memory_space<vmem>>, vector<1x128xf32>
    %c0_10 = arith.constant 0 : index
    %c0_11 = arith.constant 0 : index
    %8 = vector.load %arg10[%c0_10, %c0_11] : memref<2x32xf32, #tpu.memory_space<vmem>>, vector<2x32xf32>
    %c0_12 = arith.constant 0 : index
    %c0_13 = arith.constant 0 : index
    %9 = vector.load %arg11[%c0_12, %c0_13] : memref<2x32xf32, #tpu.memory_space<vmem>>, vector<2x32xf32>
    %c0_14 = arith.constant 0 : index
    %c0_15 = arith.constant 0 : index
    %10 = vector.load %arg12[%c0_14, %c0_15] : memref<2x32xf32, #tpu.memory_space<vmem>>, vector<2x32xf32>
    %c0_16 = arith.constant 0 : index
    %c0_17 = arith.constant 0 : index
    %11 = vector.load %arg13[%c0_16, %c0_17] : memref<2x32xf32, #tpu.memory_space<vmem>>, vector<2x32xf32>
    %c0_18 = arith.constant 0 : index
    %c0_19 = arith.constant 0 : index
    %12 = vector.load %arg14[%c0_18, %c0_19] : memref<2x32xf32, #tpu.memory_space<vmem>>, vector<2x32xf32>
    %c0_20 = arith.constant 0 : index
    %c0_21 = arith.constant 0 : index
    %13 = vector.load %arg15[%c0_20, %c0_21] : memref<2x32xf32, #tpu.memory_space<vmem>>, vector<2x32xf32>
    %c0_i32_22 = arith.constant 0 : i32
    %c8_i32 = arith.constant 8 : i32
    %14 = arith.muli %arg1, %c8_i32 : i32
    %15 = arith.addi %14, %c0_i32_22 : i32
    %16 = arith.index_cast %c0_i32_22 : i32 to index
    %c0_23 = arith.constant 0 : index
    %c0_24 = arith.constant 0 : index
    %17 = vector.load %arg2[%16, %c0_23, %c0_24] : memref<8x2x32xbf16, #tpu.memory_space<vmem>>, vector<1x2x32xbf16>
    %18 = vector.shape_cast %17 : vector<1x2x32xbf16> to vector<2x32xbf16>
    %19 = arith.truncf %8 : vector<2x32xf32> to vector<2x32xbf16>
    %20 = tpu.concatenate %18, %19 in 1 : vector<2x32xbf16>, vector<2x32xbf16> -> vector<2x64xbf16>
    %cst = arith.constant dense<0.000000e+00> : vector<2x128xf32>
    %21 = tpu.matmul %20, %4, %cst {dimension_numbers = #tpu.dot_dimension_numbers<[1], [0], [0], [1], [0, 0, 1, 1], [], []>} : vector<2x64xbf16>, vector<64x128xbf16>, vector<2x128xf32> -> vector<2x128xf32>
    %22 = vector.broadcast %6 : vector<1x128xf32> to vector<2x128xf32>
    %23 = arith.addf %21, %22 : vector<2x128xf32>
    %24 = vector.extract_strided_slice %23 {offsets = [0, 0], sizes = [2, 32], strides = [1, 1]} : vector<2x128xf32> to vector<2x32xf32>
    %25 = arith.negf %24 : vector<2x32xf32>
    %26 = math.exp %25 : vector<2x32xf32>
    %cst_25 = arith.constant 1.000000e+00 : f32
    %27 = vector.broadcast %cst_25 : f32 to vector<2x32xf32>
    %28 = arith.addf %27, %26 : vector<2x32xf32>
    %29 = arith.divf %27, %28 : vector<2x32xf32>
    %30 = vector.extract_strided_slice %23 {offsets = [0, 32], sizes = [2, 32], strides = [1, 1]} : vector<2x128xf32> to vector<2x32xf32>
    %31 = arith.negf %30 : vector<2x32xf32>
    %32 = math.exp %31 : vector<2x32xf32>
    %cst_26 = arith.constant 1.000000e+00 : f32
    %33 = vector.broadcast %cst_26 : f32 to vector<2x32xf32>
    %34 = arith.addf %33, %32 : vector<2x32xf32>
    %35 = arith.divf %33, %34 : vector<2x32xf32>
    %36 = vector.extract_strided_slice %23 {offsets = [0, 64], sizes = [2, 32], strides = [1, 1]} : vector<2x128xf32> to vector<2x32xf32>
    %37 = math.tanh %36 : vector<2x32xf32>
    %38 = vector.extract_strided_slice %23 {offsets = [0, 96], sizes = [2, 32], strides = [1, 1]} : vector<2x128xf32> to vector<2x32xf32>
    %39 = arith.negf %38 : vector<2x32xf32>
    %40 = math.exp %39 : vector<2x32xf32>
    %cst_27 = arith.constant 1.000000e+00 : f32
    %41 = vector.broadcast %cst_27 : f32 to vector<2x32xf32>
    %42 = arith.addf %41, %40 : vector<2x32xf32>
    %43 = arith.divf %41, %42 : vector<2x32xf32>
    %44 = arith.mulf %35, %9 : vector<2x32xf32>
    %45 = arith.mulf %29, %37 : vector<2x32xf32>
    %46 = arith.addf %44, %45 : vector<2x32xf32>
    %47 = math.tanh %46 : vector<2x32xf32>
    %48 = arith.mulf %43, %47 : vector<2x32xf32>
    %49 = vector.broadcast %15 : i32 to vector<2x1xi32>
    %50 = arith.cmpi sgt, %3, %49 : vector<2x1xi32>
    %51 = arith.extui %50 : vector<2x1xi1> to vector<2x1xi32>
    %52 = arith.sitofp %51 : vector<2x1xi32> to vector<2x1xf32>
    %53 = vector.broadcast %52 : vector<2x1xf32> to vector<2x32xf32>
    %54 = arith.mulf %53, %48 : vector<2x32xf32>
    %55 = arith.addf %12, %54 : vector<2x32xf32>
    %c7_i32 = arith.constant 7 : i32
    %56 = arith.subi %c7_i32, %c0_i32_22 : i32
    %57 = arith.index_cast %56 : i32 to index
    %c0_28 = arith.constant 0 : index
    %c0_29 = arith.constant 0 : index
    %58 = vector.load %arg3[%57, %c0_28, %c0_29] : memref<8x2x32xbf16, #tpu.memory_space<vmem>>, vector<1x2x32xbf16>
    %59 = vector.shape_cast %58 : vector<1x2x32xbf16> to vector<2x32xbf16>
    %60 = arith.truncf %10 : vector<2x32xf32> to vector<2x32xbf16>
    %61 = tpu.concatenate %59, %60 in 1 : vector<2x32xbf16>, vector<2x32xbf16> -> vector<2x64xbf16>
    %cst_30 = arith.constant dense<0.000000e+00> : vector<2x128xf32>
    %62 = tpu.matmul %61, %5, %cst_30 {dimension_numbers = #tpu.dot_dimension_numbers<[1], [0], [0], [1], [0, 0, 1, 1], [], []>} : vector<2x64xbf16>, vector<64x128xbf16>, vector<2x128xf32> -> vector<2x128xf32>
    %63 = vector.broadcast %7 : vector<1x128xf32> to vector<2x128xf32>
    %64 = arith.addf %62, %63 : vector<2x128xf32>
    %65 = vector.extract_strided_slice %64 {offsets = [0, 0], sizes = [2, 32], strides = [1, 1]} : vector<2x128xf32> to vector<2x32xf32>
    %66 = arith.negf %65 : vector<2x32xf32>
    %67 = math.exp %66 : vector<2x32xf32>
    %cst_31 = arith.constant 1.000000e+00 : f32
    %68 = vector.broadcast %cst_31 : f32 to vector<2x32xf32>
    %69 = arith.addf %68, %67 : vector<2x32xf32>
    %70 = arith.divf %68, %69 : vector<2x32xf32>
    %71 = vector.extract_strided_slice %64 {offsets = [0, 32], sizes = [2, 32], strides = [1, 1]} : vector<2x128xf32> to vector<2x32xf32>
    %72 = arith.negf %71 : vector<2x32xf32>
    %73 = math.exp %72 : vector<2x32xf32>
    %cst_32 = arith.constant 1.000000e+00 : f32
    %74 = vector.broadcast %cst_32 : f32 to vector<2x32xf32>
    %75 = arith.addf %74, %73 : vector<2x32xf32>
    %76 = arith.divf %74, %75 : vector<2x32xf32>
    %77 = vector.extract_strided_slice %64 {offsets = [0, 64], sizes = [2, 32], strides = [1, 1]} : vector<2x128xf32> to vector<2x32xf32>
    %78 = math.tanh %77 : vector<2x32xf32>
    %79 = vector.extract_strided_slice %64 {offsets = [0, 96], sizes = [2, 32], strides = [1, 1]} : vector<2x128xf32> to vector<2x32xf32>
    %80 = arith.negf %79 : vector<2x32xf32>
    %81 = math.exp %80 : vector<2x32xf32>
    %cst_33 = arith.constant 1.000000e+00 : f32
    %82 = vector.broadcast %cst_33 : f32 to vector<2x32xf32>
    %83 = arith.addf %82, %81 : vector<2x32xf32>
    %84 = arith.divf %82, %83 : vector<2x32xf32>
    %85 = arith.mulf %76, %11 : vector<2x32xf32>
    %86 = arith.mulf %70, %78 : vector<2x32xf32>
    %87 = arith.addf %85, %86 : vector<2x32xf32>
    %88 = math.tanh %87 : vector<2x32xf32>
    %89 = arith.mulf %84, %88 : vector<2x32xf32>
    %c7_i32_34 = arith.constant 7 : i32
    %90 = arith.subi %c7_i32_34, %15 : i32
    %91 = vector.broadcast %90 : i32 to vector<2x1xi32>
    %92 = arith.cmpi sgt, %3, %91 : vector<2x1xi32>
    %93 = arith.extui %92 : vector<2x1xi1> to vector<2x1xi32>
    %94 = arith.sitofp %93 : vector<2x1xi32> to vector<2x1xf32>
    %95 = vector.broadcast %94 : vector<2x1xf32> to vector<2x32xf32>
    %96 = arith.mulf %95, %89 : vector<2x32xf32>
    %cst_35 = arith.constant 1.000000e+00 : f32
    %97 = vector.broadcast %cst_35 : f32 to vector<2x1xf32>
    %98 = arith.subf %97, %94 : vector<2x1xf32>
    %99 = vector.broadcast %98 : vector<2x1xf32> to vector<2x32xf32>
    %100 = arith.mulf %99, %10 : vector<2x32xf32>
    %101 = arith.addf %96, %100 : vector<2x32xf32>
    %102 = vector.broadcast %94 : vector<2x1xf32> to vector<2x32xf32>
    %103 = arith.mulf %102, %87 : vector<2x32xf32>
    %cst_36 = arith.constant 1.000000e+00 : f32
    %104 = vector.broadcast %cst_36 : f32 to vector<2x1xf32>
    %105 = arith.subf %104, %94 : vector<2x1xf32>
    %106 = vector.broadcast %105 : vector<2x1xf32> to vector<2x32xf32>
    %107 = arith.mulf %106, %11 : vector<2x32xf32>
    %108 = arith.addf %103, %107 : vector<2x32xf32>
    %109 = vector.broadcast %94 : vector<2x1xf32> to vector<2x32xf32>
    %110 = arith.mulf %109, %89 : vector<2x32xf32>
    %111 = arith.addf %13, %110 : vector<2x32xf32>
    %c1_i32 = arith.constant 1 : i32
    %c8_i32_37 = arith.constant 8 : i32
    %112 = arith.muli %arg1, %c8_i32_37 : i32
    %113 = arith.addi %112, %c1_i32 : i32
    %114 = arith.index_cast %c1_i32 : i32 to index
    %c0_38 = arith.constant 0 : index
    %c0_39 = arith.constant 0 : index
    %115 = vector.load %arg2[%114, %c0_38, %c0_39] : memref<8x2x32xbf16, #tpu.memory_space<vmem>>, vector<1x2x32xbf16>
    %116 = vector.shape_cast %115 : vector<1x2x32xbf16> to vector<2x32xbf16>
    %117 = arith.truncf %48 : vector<2x32xf32> to vector<2x32xbf16>
    %118 = tpu.concatenate %116, %117 in 1 : vector<2x32xbf16>, vector<2x32xbf16> -> vector<2x64xbf16>
    %cst_40 = arith.constant dense<0.000000e+00> : vector<2x128xf32>
    %119 = tpu.matmul %118, %4, %cst_40 {dimension_numbers = #tpu.dot_dimension_numbers<[1], [0], [0], [1], [0, 0, 1, 1], [], []>} : vector<2x64xbf16>, vector<64x128xbf16>, vector<2x128xf32> -> vector<2x128xf32>
    %120 = vector.broadcast %6 : vector<1x128xf32> to vector<2x128xf32>
    %121 = arith.addf %119, %120 : vector<2x128xf32>
    %122 = vector.extract_strided_slice %121 {offsets = [0, 0], sizes = [2, 32], strides = [1, 1]} : vector<2x128xf32> to vector<2x32xf32>
    %123 = arith.negf %122 : vector<2x32xf32>
    %124 = math.exp %123 : vector<2x32xf32>
    %cst_41 = arith.constant 1.000000e+00 : f32
    %125 = vector.broadcast %cst_41 : f32 to vector<2x32xf32>
    %126 = arith.addf %125, %124 : vector<2x32xf32>
    %127 = arith.divf %125, %126 : vector<2x32xf32>
    %128 = vector.extract_strided_slice %121 {offsets = [0, 32], sizes = [2, 32], strides = [1, 1]} : vector<2x128xf32> to vector<2x32xf32>
    %129 = arith.negf %128 : vector<2x32xf32>
    %130 = math.exp %129 : vector<2x32xf32>
    %cst_42 = arith.constant 1.000000e+00 : f32
    %131 = vector.broadcast %cst_42 : f32 to vector<2x32xf32>
    %132 = arith.addf %131, %130 : vector<2x32xf32>
    %133 = arith.divf %131, %132 : vector<2x32xf32>
    %134 = vector.extract_strided_slice %121 {offsets = [0, 64], sizes = [2, 32], strides = [1, 1]} : vector<2x128xf32> to vector<2x32xf32>
    %135 = math.tanh %134 : vector<2x32xf32>
    %136 = vector.extract_strided_slice %121 {offsets = [0, 96], sizes = [2, 32], strides = [1, 1]} : vector<2x128xf32> to vector<2x32xf32>
    %137 = arith.negf %136 : vector<2x32xf32>
    %138 = math.exp %137 : vector<2x32xf32>
    %cst_43 = arith.constant 1.000000e+00 : f32
    %139 = vector.broadcast %cst_43 : f32 to vector<2x32xf32>
    %140 = arith.addf %139, %138 : vector<2x32xf32>
    %141 = arith.divf %139, %140 : vector<2x32xf32>
    %142 = arith.mulf %133, %46 : vector<2x32xf32>
    %143 = arith.mulf %127, %135 : vector<2x32xf32>
    %144 = arith.addf %142, %143 : vector<2x32xf32>
    %145 = math.tanh %144 : vector<2x32xf32>
    %146 = arith.mulf %141, %145 : vector<2x32xf32>
    %147 = vector.broadcast %113 : i32 to vector<2x1xi32>
    %148 = arith.cmpi sgt, %3, %147 : vector<2x1xi32>
    %149 = arith.extui %148 : vector<2x1xi1> to vector<2x1xi32>
    %150 = arith.sitofp %149 : vector<2x1xi32> to vector<2x1xf32>
    %151 = vector.broadcast %150 : vector<2x1xf32> to vector<2x32xf32>
    %152 = arith.mulf %151, %146 : vector<2x32xf32>
    %153 = arith.addf %55, %152 : vector<2x32xf32>
    %c7_i32_44 = arith.constant 7 : i32
    %154 = arith.subi %c7_i32_44, %c1_i32 : i32
    %155 = arith.index_cast %154 : i32 to index
    %c0_45 = arith.constant 0 : index
    %c0_46 = arith.constant 0 : index
    %156 = vector.load %arg3[%155, %c0_45, %c0_46] : memref<8x2x32xbf16, #tpu.memory_space<vmem>>, vector<1x2x32xbf16>
    %157 = vector.shape_cast %156 : vector<1x2x32xbf16> to vector<2x32xbf16>
    %158 = arith.truncf %101 : vector<2x32xf32> to vector<2x32xbf16>
    %159 = tpu.concatenate %157, %158 in 1 : vector<2x32xbf16>, vector<2x32xbf16> -> vector<2x64xbf16>
    %cst_47 = arith.constant dense<0.000000e+00> : vector<2x128xf32>
    %160 = tpu.matmul %159, %5, %cst_47 {dimension_numbers = #tpu.dot_dimension_numbers<[1], [0], [0], [1], [0, 0, 1, 1], [], []>} : vector<2x64xbf16>, vector<64x128xbf16>, vector<2x128xf32> -> vector<2x128xf32>
    %161 = vector.broadcast %7 : vector<1x128xf32> to vector<2x128xf32>
    %162 = arith.addf %160, %161 : vector<2x128xf32>
    %163 = vector.extract_strided_slice %162 {offsets = [0, 0], sizes = [2, 32], strides = [1, 1]} : vector<2x128xf32> to vector<2x32xf32>
    %164 = arith.negf %163 : vector<2x32xf32>
    %165 = math.exp %164 : vector<2x32xf32>
    %cst_48 = arith.constant 1.000000e+00 : f32
    %166 = vector.broadcast %cst_48 : f32 to vector<2x32xf32>
    %167 = arith.addf %166, %165 : vector<2x32xf32>
    %168 = arith.divf %166, %167 : vector<2x32xf32>
    %169 = vector.extract_strided_slice %162 {offsets = [0, 32], sizes = [2, 32], strides = [1, 1]} : vector<2x128xf32> to vector<2x32xf32>
    %170 = arith.negf %169 : vector<2x32xf32>
    %171 = math.exp %170 : vector<2x32xf32>
    %cst_49 = arith.constant 1.000000e+00 : f32
    %172 = vector.broadcast %cst_49 : f32 to vector<2x32xf32>
    %173 = arith.addf %172, %171 : vector<2x32xf32>
    %174 = arith.divf %172, %173 : vector<2x32xf32>
    %175 = vector.extract_strided_slice %162 {offsets = [0, 64], sizes = [2, 32], strides = [1, 1]} : vector<2x128xf32> to vector<2x32xf32>
    %176 = math.tanh %175 : vector<2x32xf32>
    %177 = vector.extract_strided_slice %162 {offsets = [0, 96], sizes = [2, 32], strides = [1, 1]} : vector<2x128xf32> to vector<2x32xf32>
    %178 = arith.negf %177 : vector<2x32xf32>
    %179 = math.exp %178 : vector<2x32xf32>
    %cst_50 = arith.constant 1.000000e+00 : f32
    %180 = vector.broadcast %cst_50 : f32 to vector<2x32xf32>
    %181 = arith.addf %180, %179 : vector<2x32xf32>
    %182 = arith.divf %180, %181 : vector<2x32xf32>
    %183 = arith.mulf %174, %108 : vector<2x32xf32>
    %184 = arith.mulf %168, %176 : vector<2x32xf32>
    %185 = arith.addf %183, %184 : vector<2x32xf32>
    %186 = math.tanh %185 : vector<2x32xf32>
    %187 = arith.mulf %182, %186 : vector<2x32xf32>
    %c7_i32_51 = arith.constant 7 : i32
    %188 = arith.subi %c7_i32_51, %113 : i32
    %189 = vector.broadcast %188 : i32 to vector<2x1xi32>
    %190 = arith.cmpi sgt, %3, %189 : vector<2x1xi32>
    %191 = arith.extui %190 : vector<2x1xi1> to vector<2x1xi32>
    %192 = arith.sitofp %191 : vector<2x1xi32> to vector<2x1xf32>
    %193 = vector.broadcast %192 : vector<2x1xf32> to vector<2x32xf32>
    %194 = arith.mulf %193, %187 : vector<2x32xf32>
    %cst_52 = arith.constant 1.000000e+00 : f32
    %195 = vector.broadcast %cst_52 : f32 to vector<2x1xf32>
    %196 = arith.subf %195, %192 : vector<2x1xf32>
    %197 = vector.broadcast %196 : vector<2x1xf32> to vector<2x32xf32>
    %198 = arith.mulf %197, %101 : vector<2x32xf32>
    %199 = arith.addf %194, %198 : vector<2x32xf32>
    %200 = vector.broadcast %192 : vector<2x1xf32> to vector<2x32xf32>
    %201 = arith.mulf %200, %185 : vector<2x32xf32>
    %cst_53 = arith.constant 1.000000e+00 : f32
    %202 = vector.broadcast %cst_53 : f32 to vector<2x1xf32>
    %203 = arith.subf %202, %192 : vector<2x1xf32>
    %204 = vector.broadcast %203 : vector<2x1xf32> to vector<2x32xf32>
    %205 = arith.mulf %204, %108 : vector<2x32xf32>
    %206 = arith.addf %201, %205 : vector<2x32xf32>
    %207 = vector.broadcast %192 : vector<2x1xf32> to vector<2x32xf32>
    %208 = arith.mulf %207, %187 : vector<2x32xf32>
    %209 = arith.addf %111, %208 : vector<2x32xf32>
    %c2_i32 = arith.constant 2 : i32
    %c8_i32_54 = arith.constant 8 : i32
    %210 = arith.muli %arg1, %c8_i32_54 : i32
    %211 = arith.addi %210, %c2_i32 : i32
    %212 = arith.index_cast %c2_i32 : i32 to index
    %c0_55 = arith.constant 0 : index
    %c0_56 = arith.constant 0 : index
    %213 = vector.load %arg2[%212, %c0_55, %c0_56] : memref<8x2x32xbf16, #tpu.memory_space<vmem>>, vector<1x2x32xbf16>
    %214 = vector.shape_cast %213 : vector<1x2x32xbf16> to vector<2x32xbf16>
    %215 = arith.truncf %146 : vector<2x32xf32> to vector<2x32xbf16>
    %216 = tpu.concatenate %214, %215 in 1 : vector<2x32xbf16>, vector<2x32xbf16> -> vector<2x64xbf16>
    %cst_57 = arith.constant dense<0.000000e+00> : vector<2x128xf32>
    %217 = tpu.matmul %216, %4, %cst_57 {dimension_numbers = #tpu.dot_dimension_numbers<[1], [0], [0], [1], [0, 0, 1, 1], [], []>} : vector<2x64xbf16>, vector<64x128xbf16>, vector<2x128xf32> -> vector<2x128xf32>
    %218 = vector.broadcast %6 : vector<1x128xf32> to vector<2x128xf32>
    %219 = arith.addf %217, %218 : vector<2x128xf32>
    %220 = vector.extract_strided_slice %219 {offsets = [0, 0], sizes = [2, 32], strides = [1, 1]} : vector<2x128xf32> to vector<2x32xf32>
    %221 = arith.negf %220 : vector<2x32xf32>
    %222 = math.exp %221 : vector<2x32xf32>
    %cst_58 = arith.constant 1.000000e+00 : f32
    %223 = vector.broadcast %cst_58 : f32 to vector<2x32xf32>
    %224 = arith.addf %223, %222 : vector<2x32xf32>
    %225 = arith.divf %223, %224 : vector<2x32xf32>
    %226 = vector.extract_strided_slice %219 {offsets = [0, 32], sizes = [2, 32], strides = [1, 1]} : vector<2x128xf32> to vector<2x32xf32>
    %227 = arith.negf %226 : vector<2x32xf32>
    %228 = math.exp %227 : vector<2x32xf32>
    %cst_59 = arith.constant 1.000000e+00 : f32
    %229 = vector.broadcast %cst_59 : f32 to vector<2x32xf32>
    %230 = arith.addf %229, %228 : vector<2x32xf32>
    %231 = arith.divf %229, %230 : vector<2x32xf32>
    %232 = vector.extract_strided_slice %219 {offsets = [0, 64], sizes = [2, 32], strides = [1, 1]} : vector<2x128xf32> to vector<2x32xf32>
    %233 = math.tanh %232 : vector<2x32xf32>
    %234 = vector.extract_strided_slice %219 {offsets = [0, 96], sizes = [2, 32], strides = [1, 1]} : vector<2x128xf32> to vector<2x32xf32>
    %235 = arith.negf %234 : vector<2x32xf32>
    %236 = math.exp %235 : vector<2x32xf32>
    %cst_60 = arith.constant 1.000000e+00 : f32
    %237 = vector.broadcast %cst_60 : f32 to vector<2x32xf32>
    %238 = arith.addf %237, %236 : vector<2x32xf32>
    %239 = arith.divf %237, %238 : vector<2x32xf32>
    %240 = arith.mulf %231, %144 : vector<2x32xf32>
    %241 = arith.mulf %225, %233 : vector<2x32xf32>
    %242 = arith.addf %240, %241 : vector<2x32xf32>
    %243 = math.tanh %242 : vector<2x32xf32>
    %244 = arith.mulf %239, %243 : vector<2x32xf32>
    %245 = vector.broadcast %211 : i32 to vector<2x1xi32>
    %246 = arith.cmpi sgt, %3, %245 : vector<2x1xi32>
    %247 = arith.extui %246 : vector<2x1xi1> to vector<2x1xi32>
    %248 = arith.sitofp %247 : vector<2x1xi32> to vector<2x1xf32>
    %249 = vector.broadcast %248 : vector<2x1xf32> to vector<2x32xf32>
    %250 = arith.mulf %249, %244 : vector<2x32xf32>
    %251 = arith.addf %153, %250 : vector<2x32xf32>
    %c7_i32_61 = arith.constant 7 : i32
    %252 = arith.subi %c7_i32_61, %c2_i32 : i32
    %253 = arith.index_cast %252 : i32 to index
    %c0_62 = arith.constant 0 : index
    %c0_63 = arith.constant 0 : index
    %254 = vector.load %arg3[%253, %c0_62, %c0_63] : memref<8x2x32xbf16, #tpu.memory_space<vmem>>, vector<1x2x32xbf16>
    %255 = vector.shape_cast %254 : vector<1x2x32xbf16> to vector<2x32xbf16>
    %256 = arith.truncf %199 : vector<2x32xf32> to vector<2x32xbf16>
    %257 = tpu.concatenate %255, %256 in 1 : vector<2x32xbf16>, vector<2x32xbf16> -> vector<2x64xbf16>
    %cst_64 = arith.constant dense<0.000000e+00> : vector<2x128xf32>
    %258 = tpu.matmul %257, %5, %cst_64 {dimension_numbers = #tpu.dot_dimension_numbers<[1], [0], [0], [1], [0, 0, 1, 1], [], []>} : vector<2x64xbf16>, vector<64x128xbf16>, vector<2x128xf32> -> vector<2x128xf32>
    %259 = vector.broadcast %7 : vector<1x128xf32> to vector<2x128xf32>
    %260 = arith.addf %258, %259 : vector<2x128xf32>
    %261 = vector.extract_strided_slice %260 {offsets = [0, 0], sizes = [2, 32], strides = [1, 1]} : vector<2x128xf32> to vector<2x32xf32>
    %262 = arith.negf %261 : vector<2x32xf32>
    %263 = math.exp %262 : vector<2x32xf32>
    %cst_65 = arith.constant 1.000000e+00 : f32
    %264 = vector.broadcast %cst_65 : f32 to vector<2x32xf32>
    %265 = arith.addf %264, %263 : vector<2x32xf32>
    %266 = arith.divf %264, %265 : vector<2x32xf32>
    %267 = vector.extract_strided_slice %260 {offsets = [0, 32], sizes = [2, 32], strides = [1, 1]} : vector<2x128xf32> to vector<2x32xf32>
    %268 = arith.negf %267 : vector<2x32xf32>
    %269 = math.exp %268 : vector<2x32xf32>
    %cst_66 = arith.constant 1.000000e+00 : f32
    %270 = vector.broadcast %cst_66 : f32 to vector<2x32xf32>
    %271 = arith.addf %270, %269 : vector<2x32xf32>
    %272 = arith.divf %270, %271 : vector<2x32xf32>
    %273 = vector.extract_strided_slice %260 {offsets = [0, 64], sizes = [2, 32], strides = [1, 1]} : vector<2x128xf32> to vector<2x32xf32>
    %274 = math.tanh %273 : vector<2x32xf32>
    %275 = vector.extract_strided_slice %260 {offsets = [0, 96], sizes = [2, 32], strides = [1, 1]} : vector<2x128xf32> to vector<2x32xf32>
    %276 = arith.negf %275 : vector<2x32xf32>
    %277 = math.exp %276 : vector<2x32xf32>
    %cst_67 = arith.constant 1.000000e+00 : f32
    %278 = vector.broadcast %cst_67 : f32 to vector<2x32xf32>
    %279 = arith.addf %278, %277 : vector<2x32xf32>
    %280 = arith.divf %278, %279 : vector<2x32xf32>
    %281 = arith.mulf %272, %206 : vector<2x32xf32>
    %282 = arith.mulf %266, %274 : vector<2x32xf32>
    %283 = arith.addf %281, %282 : vector<2x32xf32>
    %284 = math.tanh %283 : vector<2x32xf32>
    %285 = arith.mulf %280, %284 : vector<2x32xf32>
    %c7_i32_68 = arith.constant 7 : i32
    %286 = arith.subi %c7_i32_68, %211 : i32
    %287 = vector.broadcast %286 : i32 to vector<2x1xi32>
    %288 = arith.cmpi sgt, %3, %287 : vector<2x1xi32>
    %289 = arith.extui %288 : vector<2x1xi1> to vector<2x1xi32>
    %290 = arith.sitofp %289 : vector<2x1xi32> to vector<2x1xf32>
    %291 = vector.broadcast %290 : vector<2x1xf32> to vector<2x32xf32>
    %292 = arith.mulf %291, %285 : vector<2x32xf32>
    %cst_69 = arith.constant 1.000000e+00 : f32
    %293 = vector.broadcast %cst_69 : f32 to vector<2x1xf32>
    %294 = arith.subf %293, %290 : vector<2x1xf32>
    %295 = vector.broadcast %294 : vector<2x1xf32> to vector<2x32xf32>
    %296 = arith.mulf %295, %199 : vector<2x32xf32>
    %297 = arith.addf %292, %296 : vector<2x32xf32>
    %298 = vector.broadcast %290 : vector<2x1xf32> to vector<2x32xf32>
    %299 = arith.mulf %298, %283 : vector<2x32xf32>
    %cst_70 = arith.constant 1.000000e+00 : f32
    %300 = vector.broadcast %cst_70 : f32 to vector<2x1xf32>
    %301 = arith.subf %300, %290 : vector<2x1xf32>
    %302 = vector.broadcast %301 : vector<2x1xf32> to vector<2x32xf32>
    %303 = arith.mulf %302, %206 : vector<2x32xf32>
    %304 = arith.addf %299, %303 : vector<2x32xf32>
    %305 = vector.broadcast %290 : vector<2x1xf32> to vector<2x32xf32>
    %306 = arith.mulf %305, %285 : vector<2x32xf32>
    %307 = arith.addf %209, %306 : vector<2x32xf32>
    %c3_i32 = arith.constant 3 : i32
    %c8_i32_71 = arith.constant 8 : i32
    %308 = arith.muli %arg1, %c8_i32_71 : i32
    %309 = arith.addi %308, %c3_i32 : i32
    %310 = arith.index_cast %c3_i32 : i32 to index
    %c0_72 = arith.constant 0 : index
    %c0_73 = arith.constant 0 : index
    %311 = vector.load %arg2[%310, %c0_72, %c0_73] : memref<8x2x32xbf16, #tpu.memory_space<vmem>>, vector<1x2x32xbf16>
    %312 = vector.shape_cast %311 : vector<1x2x32xbf16> to vector<2x32xbf16>
    %313 = arith.truncf %244 : vector<2x32xf32> to vector<2x32xbf16>
    %314 = tpu.concatenate %312, %313 in 1 : vector<2x32xbf16>, vector<2x32xbf16> -> vector<2x64xbf16>
    %cst_74 = arith.constant dense<0.000000e+00> : vector<2x128xf32>
    %315 = tpu.matmul %314, %4, %cst_74 {dimension_numbers = #tpu.dot_dimension_numbers<[1], [0], [0], [1], [0, 0, 1, 1], [], []>} : vector<2x64xbf16>, vector<64x128xbf16>, vector<2x128xf32> -> vector<2x128xf32>
    %316 = vector.broadcast %6 : vector<1x128xf32> to vector<2x128xf32>
    %317 = arith.addf %315, %316 : vector<2x128xf32>
    %318 = vector.extract_strided_slice %317 {offsets = [0, 0], sizes = [2, 32], strides = [1, 1]} : vector<2x128xf32> to vector<2x32xf32>
    %319 = arith.negf %318 : vector<2x32xf32>
    %320 = math.exp %319 : vector<2x32xf32>
    %cst_75 = arith.constant 1.000000e+00 : f32
    %321 = vector.broadcast %cst_75 : f32 to vector<2x32xf32>
    %322 = arith.addf %321, %320 : vector<2x32xf32>
    %323 = arith.divf %321, %322 : vector<2x32xf32>
    %324 = vector.extract_strided_slice %317 {offsets = [0, 32], sizes = [2, 32], strides = [1, 1]} : vector<2x128xf32> to vector<2x32xf32>
    %325 = arith.negf %324 : vector<2x32xf32>
    %326 = math.exp %325 : vector<2x32xf32>
    %cst_76 = arith.constant 1.000000e+00 : f32
    %327 = vector.broadcast %cst_76 : f32 to vector<2x32xf32>
    %328 = arith.addf %327, %326 : vector<2x32xf32>
    %329 = arith.divf %327, %328 : vector<2x32xf32>
    %330 = vector.extract_strided_slice %317 {offsets = [0, 64], sizes = [2, 32], strides = [1, 1]} : vector<2x128xf32> to vector<2x32xf32>
    %331 = math.tanh %330 : vector<2x32xf32>
    %332 = vector.extract_strided_slice %317 {offsets = [0, 96], sizes = [2, 32], strides = [1, 1]} : vector<2x128xf32> to vector<2x32xf32>
    %333 = arith.negf %332 : vector<2x32xf32>
    %334 = math.exp %333 : vector<2x32xf32>
    %cst_77 = arith.constant 1.000000e+00 : f32
    %335 = vector.broadcast %cst_77 : f32 to vector<2x32xf32>
    %336 = arith.addf %335, %334 : vector<2x32xf32>
    %337 = arith.divf %335, %336 : vector<2x32xf32>
    %338 = arith.mulf %329, %242 : vector<2x32xf32>
    %339 = arith.mulf %323, %331 : vector<2x32xf32>
    %340 = arith.addf %338, %339 : vector<2x32xf32>
    %341 = math.tanh %340 : vector<2x32xf32>
    %342 = arith.mulf %337, %341 : vector<2x32xf32>
    %343 = vector.broadcast %309 : i32 to vector<2x1xi32>
    %344 = arith.cmpi sgt, %3, %343 : vector<2x1xi32>
    %345 = arith.extui %344 : vector<2x1xi1> to vector<2x1xi32>
    %346 = arith.sitofp %345 : vector<2x1xi32> to vector<2x1xf32>
    %347 = vector.broadcast %346 : vector<2x1xf32> to vector<2x32xf32>
    %348 = arith.mulf %347, %342 : vector<2x32xf32>
    %349 = arith.addf %251, %348 : vector<2x32xf32>
    %c7_i32_78 = arith.constant 7 : i32
    %350 = arith.subi %c7_i32_78, %c3_i32 : i32
    %351 = arith.index_cast %350 : i32 to index
    %c0_79 = arith.constant 0 : index
    %c0_80 = arith.constant 0 : index
    %352 = vector.load %arg3[%351, %c0_79, %c0_80] : memref<8x2x32xbf16, #tpu.memory_space<vmem>>, vector<1x2x32xbf16>
    %353 = vector.shape_cast %352 : vector<1x2x32xbf16> to vector<2x32xbf16>
    %354 = arith.truncf %297 : vector<2x32xf32> to vector<2x32xbf16>
    %355 = tpu.concatenate %353, %354 in 1 : vector<2x32xbf16>, vector<2x32xbf16> -> vector<2x64xbf16>
    %cst_81 = arith.constant dense<0.000000e+00> : vector<2x128xf32>
    %356 = tpu.matmul %355, %5, %cst_81 {dimension_numbers = #tpu.dot_dimension_numbers<[1], [0], [0], [1], [0, 0, 1, 1], [], []>} : vector<2x64xbf16>, vector<64x128xbf16>, vector<2x128xf32> -> vector<2x128xf32>
    %357 = vector.broadcast %7 : vector<1x128xf32> to vector<2x128xf32>
    %358 = arith.addf %356, %357 : vector<2x128xf32>
    %359 = vector.extract_strided_slice %358 {offsets = [0, 0], sizes = [2, 32], strides = [1, 1]} : vector<2x128xf32> to vector<2x32xf32>
    %360 = arith.negf %359 : vector<2x32xf32>
    %361 = math.exp %360 : vector<2x32xf32>
    %cst_82 = arith.constant 1.000000e+00 : f32
    %362 = vector.broadcast %cst_82 : f32 to vector<2x32xf32>
    %363 = arith.addf %362, %361 : vector<2x32xf32>
    %364 = arith.divf %362, %363 : vector<2x32xf32>
    %365 = vector.extract_strided_slice %358 {offsets = [0, 32], sizes = [2, 32], strides = [1, 1]} : vector<2x128xf32> to vector<2x32xf32>
    %366 = arith.negf %365 : vector<2x32xf32>
    %367 = math.exp %366 : vector<2x32xf32>
    %cst_83 = arith.constant 1.000000e+00 : f32
    %368 = vector.broadcast %cst_83 : f32 to vector<2x32xf32>
    %369 = arith.addf %368, %367 : vector<2x32xf32>
    %370 = arith.divf %368, %369 : vector<2x32xf32>
    %371 = vector.extract_strided_slice %358 {offsets = [0, 64], sizes = [2, 32], strides = [1, 1]} : vector<2x128xf32> to vector<2x32xf32>
    %372 = math.tanh %371 : vector<2x32xf32>
    %373 = vector.extract_strided_slice %358 {offsets = [0, 96], sizes = [2, 32], strides = [1, 1]} : vector<2x128xf32> to vector<2x32xf32>
    %374 = arith.negf %373 : vector<2x32xf32>
    %375 = math.exp %374 : vector<2x32xf32>
    %cst_84 = arith.constant 1.000000e+00 : f32
    %376 = vector.broadcast %cst_84 : f32 to vector<2x32xf32>
    %377 = arith.addf %376, %375 : vector<2x32xf32>
    %378 = arith.divf %376, %377 : vector<2x32xf32>
    %379 = arith.mulf %370, %304 : vector<2x32xf32>
    %380 = arith.mulf %364, %372 : vector<2x32xf32>
    %381 = arith.addf %379, %380 : vector<2x32xf32>
    %382 = math.tanh %381 : vector<2x32xf32>
    %383 = arith.mulf %378, %382 : vector<2x32xf32>
    %c7_i32_85 = arith.constant 7 : i32
    %384 = arith.subi %c7_i32_85, %309 : i32
    %385 = vector.broadcast %384 : i32 to vector<2x1xi32>
    %386 = arith.cmpi sgt, %3, %385 : vector<2x1xi32>
    %387 = arith.extui %386 : vector<2x1xi1> to vector<2x1xi32>
    %388 = arith.sitofp %387 : vector<2x1xi32> to vector<2x1xf32>
    %389 = vector.broadcast %388 : vector<2x1xf32> to vector<2x32xf32>
    %390 = arith.mulf %389, %383 : vector<2x32xf32>
    %cst_86 = arith.constant 1.000000e+00 : f32
    %391 = vector.broadcast %cst_86 : f32 to vector<2x1xf32>
    %392 = arith.subf %391, %388 : vector<2x1xf32>
    %393 = vector.broadcast %392 : vector<2x1xf32> to vector<2x32xf32>
    %394 = arith.mulf %393, %297 : vector<2x32xf32>
    %395 = arith.addf %390, %394 : vector<2x32xf32>
    %396 = vector.broadcast %388 : vector<2x1xf32> to vector<2x32xf32>
    %397 = arith.mulf %396, %381 : vector<2x32xf32>
    %cst_87 = arith.constant 1.000000e+00 : f32
    %398 = vector.broadcast %cst_87 : f32 to vector<2x1xf32>
    %399 = arith.subf %398, %388 : vector<2x1xf32>
    %400 = vector.broadcast %399 : vector<2x1xf32> to vector<2x32xf32>
    %401 = arith.mulf %400, %304 : vector<2x32xf32>
    %402 = arith.addf %397, %401 : vector<2x32xf32>
    %403 = vector.broadcast %388 : vector<2x1xf32> to vector<2x32xf32>
    %404 = arith.mulf %403, %383 : vector<2x32xf32>
    %405 = arith.addf %307, %404 : vector<2x32xf32>
    %c4_i32 = arith.constant 4 : i32
    %c8_i32_88 = arith.constant 8 : i32
    %406 = arith.muli %arg1, %c8_i32_88 : i32
    %407 = arith.addi %406, %c4_i32 : i32
    %408 = arith.index_cast %c4_i32 : i32 to index
    %c0_89 = arith.constant 0 : index
    %c0_90 = arith.constant 0 : index
    %409 = vector.load %arg2[%408, %c0_89, %c0_90] : memref<8x2x32xbf16, #tpu.memory_space<vmem>>, vector<1x2x32xbf16>
    %410 = vector.shape_cast %409 : vector<1x2x32xbf16> to vector<2x32xbf16>
    %411 = arith.truncf %342 : vector<2x32xf32> to vector<2x32xbf16>
    %412 = tpu.concatenate %410, %411 in 1 : vector<2x32xbf16>, vector<2x32xbf16> -> vector<2x64xbf16>
    %cst_91 = arith.constant dense<0.000000e+00> : vector<2x128xf32>
    %413 = tpu.matmul %412, %4, %cst_91 {dimension_numbers = #tpu.dot_dimension_numbers<[1], [0], [0], [1], [0, 0, 1, 1], [], []>} : vector<2x64xbf16>, vector<64x128xbf16>, vector<2x128xf32> -> vector<2x128xf32>
    %414 = vector.broadcast %6 : vector<1x128xf32> to vector<2x128xf32>
    %415 = arith.addf %413, %414 : vector<2x128xf32>
    %416 = vector.extract_strided_slice %415 {offsets = [0, 0], sizes = [2, 32], strides = [1, 1]} : vector<2x128xf32> to vector<2x32xf32>
    %417 = arith.negf %416 : vector<2x32xf32>
    %418 = math.exp %417 : vector<2x32xf32>
    %cst_92 = arith.constant 1.000000e+00 : f32
    %419 = vector.broadcast %cst_92 : f32 to vector<2x32xf32>
    %420 = arith.addf %419, %418 : vector<2x32xf32>
    %421 = arith.divf %419, %420 : vector<2x32xf32>
    %422 = vector.extract_strided_slice %415 {offsets = [0, 32], sizes = [2, 32], strides = [1, 1]} : vector<2x128xf32> to vector<2x32xf32>
    %423 = arith.negf %422 : vector<2x32xf32>
    %424 = math.exp %423 : vector<2x32xf32>
    %cst_93 = arith.constant 1.000000e+00 : f32
    %425 = vector.broadcast %cst_93 : f32 to vector<2x32xf32>
    %426 = arith.addf %425, %424 : vector<2x32xf32>
    %427 = arith.divf %425, %426 : vector<2x32xf32>
    %428 = vector.extract_strided_slice %415 {offsets = [0, 64], sizes = [2, 32], strides = [1, 1]} : vector<2x128xf32> to vector<2x32xf32>
    %429 = math.tanh %428 : vector<2x32xf32>
    %430 = vector.extract_strided_slice %415 {offsets = [0, 96], sizes = [2, 32], strides = [1, 1]} : vector<2x128xf32> to vector<2x32xf32>
    %431 = arith.negf %430 : vector<2x32xf32>
    %432 = math.exp %431 : vector<2x32xf32>
    %cst_94 = arith.constant 1.000000e+00 : f32
    %433 = vector.broadcast %cst_94 : f32 to vector<2x32xf32>
    %434 = arith.addf %433, %432 : vector<2x32xf32>
    %435 = arith.divf %433, %434 : vector<2x32xf32>
    %436 = arith.mulf %427, %340 : vector<2x32xf32>
    %437 = arith.mulf %421, %429 : vector<2x32xf32>
    %438 = arith.addf %436, %437 : vector<2x32xf32>
    %439 = math.tanh %438 : vector<2x32xf32>
    %440 = arith.mulf %435, %439 : vector<2x32xf32>
    %441 = vector.broadcast %407 : i32 to vector<2x1xi32>
    %442 = arith.cmpi sgt, %3, %441 : vector<2x1xi32>
    %443 = arith.extui %442 : vector<2x1xi1> to vector<2x1xi32>
    %444 = arith.sitofp %443 : vector<2x1xi32> to vector<2x1xf32>
    %445 = vector.broadcast %444 : vector<2x1xf32> to vector<2x32xf32>
    %446 = arith.mulf %445, %440 : vector<2x32xf32>
    %447 = arith.addf %349, %446 : vector<2x32xf32>
    %c7_i32_95 = arith.constant 7 : i32
    %448 = arith.subi %c7_i32_95, %c4_i32 : i32
    %449 = arith.index_cast %448 : i32 to index
    %c0_96 = arith.constant 0 : index
    %c0_97 = arith.constant 0 : index
    %450 = vector.load %arg3[%449, %c0_96, %c0_97] : memref<8x2x32xbf16, #tpu.memory_space<vmem>>, vector<1x2x32xbf16>
    %451 = vector.shape_cast %450 : vector<1x2x32xbf16> to vector<2x32xbf16>
    %452 = arith.truncf %395 : vector<2x32xf32> to vector<2x32xbf16>
    %453 = tpu.concatenate %451, %452 in 1 : vector<2x32xbf16>, vector<2x32xbf16> -> vector<2x64xbf16>
    %cst_98 = arith.constant dense<0.000000e+00> : vector<2x128xf32>
    %454 = tpu.matmul %453, %5, %cst_98 {dimension_numbers = #tpu.dot_dimension_numbers<[1], [0], [0], [1], [0, 0, 1, 1], [], []>} : vector<2x64xbf16>, vector<64x128xbf16>, vector<2x128xf32> -> vector<2x128xf32>
    %455 = vector.broadcast %7 : vector<1x128xf32> to vector<2x128xf32>
    %456 = arith.addf %454, %455 : vector<2x128xf32>
    %457 = vector.extract_strided_slice %456 {offsets = [0, 0], sizes = [2, 32], strides = [1, 1]} : vector<2x128xf32> to vector<2x32xf32>
    %458 = arith.negf %457 : vector<2x32xf32>
    %459 = math.exp %458 : vector<2x32xf32>
    %cst_99 = arith.constant 1.000000e+00 : f32
    %460 = vector.broadcast %cst_99 : f32 to vector<2x32xf32>
    %461 = arith.addf %460, %459 : vector<2x32xf32>
    %462 = arith.divf %460, %461 : vector<2x32xf32>
    %463 = vector.extract_strided_slice %456 {offsets = [0, 32], sizes = [2, 32], strides = [1, 1]} : vector<2x128xf32> to vector<2x32xf32>
    %464 = arith.negf %463 : vector<2x32xf32>
    %465 = math.exp %464 : vector<2x32xf32>
    %cst_100 = arith.constant 1.000000e+00 : f32
    %466 = vector.broadcast %cst_100 : f32 to vector<2x32xf32>
    %467 = arith.addf %466, %465 : vector<2x32xf32>
    %468 = arith.divf %466, %467 : vector<2x32xf32>
    %469 = vector.extract_strided_slice %456 {offsets = [0, 64], sizes = [2, 32], strides = [1, 1]} : vector<2x128xf32> to vector<2x32xf32>
    %470 = math.tanh %469 : vector<2x32xf32>
    %471 = vector.extract_strided_slice %456 {offsets = [0, 96], sizes = [2, 32], strides = [1, 1]} : vector<2x128xf32> to vector<2x32xf32>
    %472 = arith.negf %471 : vector<2x32xf32>
    %473 = math.exp %472 : vector<2x32xf32>
    %cst_101 = arith.constant 1.000000e+00 : f32
    %474 = vector.broadcast %cst_101 : f32 to vector<2x32xf32>
    %475 = arith.addf %474, %473 : vector<2x32xf32>
    %476 = arith.divf %474, %475 : vector<2x32xf32>
    %477 = arith.mulf %468, %402 : vector<2x32xf32>
    %478 = arith.mulf %462, %470 : vector<2x32xf32>
    %479 = arith.addf %477, %478 : vector<2x32xf32>
    %480 = math.tanh %479 : vector<2x32xf32>
    %481 = arith.mulf %476, %480 : vector<2x32xf32>
    %c7_i32_102 = arith.constant 7 : i32
    %482 = arith.subi %c7_i32_102, %407 : i32
    %483 = vector.broadcast %482 : i32 to vector<2x1xi32>
    %484 = arith.cmpi sgt, %3, %483 : vector<2x1xi32>
    %485 = arith.extui %484 : vector<2x1xi1> to vector<2x1xi32>
    %486 = arith.sitofp %485 : vector<2x1xi32> to vector<2x1xf32>
    %487 = vector.broadcast %486 : vector<2x1xf32> to vector<2x32xf32>
    %488 = arith.mulf %487, %481 : vector<2x32xf32>
    %cst_103 = arith.constant 1.000000e+00 : f32
    %489 = vector.broadcast %cst_103 : f32 to vector<2x1xf32>
    %490 = arith.subf %489, %486 : vector<2x1xf32>
    %491 = vector.broadcast %490 : vector<2x1xf32> to vector<2x32xf32>
    %492 = arith.mulf %491, %395 : vector<2x32xf32>
    %493 = arith.addf %488, %492 : vector<2x32xf32>
    %494 = vector.broadcast %486 : vector<2x1xf32> to vector<2x32xf32>
    %495 = arith.mulf %494, %479 : vector<2x32xf32>
    %cst_104 = arith.constant 1.000000e+00 : f32
    %496 = vector.broadcast %cst_104 : f32 to vector<2x1xf32>
    %497 = arith.subf %496, %486 : vector<2x1xf32>
    %498 = vector.broadcast %497 : vector<2x1xf32> to vector<2x32xf32>
    %499 = arith.mulf %498, %402 : vector<2x32xf32>
    %500 = arith.addf %495, %499 : vector<2x32xf32>
    %501 = vector.broadcast %486 : vector<2x1xf32> to vector<2x32xf32>
    %502 = arith.mulf %501, %481 : vector<2x32xf32>
    %503 = arith.addf %405, %502 : vector<2x32xf32>
    %c5_i32 = arith.constant 5 : i32
    %c8_i32_105 = arith.constant 8 : i32
    %504 = arith.muli %arg1, %c8_i32_105 : i32
    %505 = arith.addi %504, %c5_i32 : i32
    %506 = arith.index_cast %c5_i32 : i32 to index
    %c0_106 = arith.constant 0 : index
    %c0_107 = arith.constant 0 : index
    %507 = vector.load %arg2[%506, %c0_106, %c0_107] : memref<8x2x32xbf16, #tpu.memory_space<vmem>>, vector<1x2x32xbf16>
    %508 = vector.shape_cast %507 : vector<1x2x32xbf16> to vector<2x32xbf16>
    %509 = arith.truncf %440 : vector<2x32xf32> to vector<2x32xbf16>
    %510 = tpu.concatenate %508, %509 in 1 : vector<2x32xbf16>, vector<2x32xbf16> -> vector<2x64xbf16>
    %cst_108 = arith.constant dense<0.000000e+00> : vector<2x128xf32>
    %511 = tpu.matmul %510, %4, %cst_108 {dimension_numbers = #tpu.dot_dimension_numbers<[1], [0], [0], [1], [0, 0, 1, 1], [], []>} : vector<2x64xbf16>, vector<64x128xbf16>, vector<2x128xf32> -> vector<2x128xf32>
    %512 = vector.broadcast %6 : vector<1x128xf32> to vector<2x128xf32>
    %513 = arith.addf %511, %512 : vector<2x128xf32>
    %514 = vector.extract_strided_slice %513 {offsets = [0, 0], sizes = [2, 32], strides = [1, 1]} : vector<2x128xf32> to vector<2x32xf32>
    %515 = arith.negf %514 : vector<2x32xf32>
    %516 = math.exp %515 : vector<2x32xf32>
    %cst_109 = arith.constant 1.000000e+00 : f32
    %517 = vector.broadcast %cst_109 : f32 to vector<2x32xf32>
    %518 = arith.addf %517, %516 : vector<2x32xf32>
    %519 = arith.divf %517, %518 : vector<2x32xf32>
    %520 = vector.extract_strided_slice %513 {offsets = [0, 32], sizes = [2, 32], strides = [1, 1]} : vector<2x128xf32> to vector<2x32xf32>
    %521 = arith.negf %520 : vector<2x32xf32>
    %522 = math.exp %521 : vector<2x32xf32>
    %cst_110 = arith.constant 1.000000e+00 : f32
    %523 = vector.broadcast %cst_110 : f32 to vector<2x32xf32>
    %524 = arith.addf %523, %522 : vector<2x32xf32>
    %525 = arith.divf %523, %524 : vector<2x32xf32>
    %526 = vector.extract_strided_slice %513 {offsets = [0, 64], sizes = [2, 32], strides = [1, 1]} : vector<2x128xf32> to vector<2x32xf32>
    %527 = math.tanh %526 : vector<2x32xf32>
    %528 = vector.extract_strided_slice %513 {offsets = [0, 96], sizes = [2, 32], strides = [1, 1]} : vector<2x128xf32> to vector<2x32xf32>
    %529 = arith.negf %528 : vector<2x32xf32>
    %530 = math.exp %529 : vector<2x32xf32>
    %cst_111 = arith.constant 1.000000e+00 : f32
    %531 = vector.broadcast %cst_111 : f32 to vector<2x32xf32>
    %532 = arith.addf %531, %530 : vector<2x32xf32>
    %533 = arith.divf %531, %532 : vector<2x32xf32>
    %534 = arith.mulf %525, %438 : vector<2x32xf32>
    %535 = arith.mulf %519, %527 : vector<2x32xf32>
    %536 = arith.addf %534, %535 : vector<2x32xf32>
    %537 = math.tanh %536 : vector<2x32xf32>
    %538 = arith.mulf %533, %537 : vector<2x32xf32>
    %539 = vector.broadcast %505 : i32 to vector<2x1xi32>
    %540 = arith.cmpi sgt, %3, %539 : vector<2x1xi32>
    %541 = arith.extui %540 : vector<2x1xi1> to vector<2x1xi32>
    %542 = arith.sitofp %541 : vector<2x1xi32> to vector<2x1xf32>
    %543 = vector.broadcast %542 : vector<2x1xf32> to vector<2x32xf32>
    %544 = arith.mulf %543, %538 : vector<2x32xf32>
    %545 = arith.addf %447, %544 : vector<2x32xf32>
    %c7_i32_112 = arith.constant 7 : i32
    %546 = arith.subi %c7_i32_112, %c5_i32 : i32
    %547 = arith.index_cast %546 : i32 to index
    %c0_113 = arith.constant 0 : index
    %c0_114 = arith.constant 0 : index
    %548 = vector.load %arg3[%547, %c0_113, %c0_114] : memref<8x2x32xbf16, #tpu.memory_space<vmem>>, vector<1x2x32xbf16>
    %549 = vector.shape_cast %548 : vector<1x2x32xbf16> to vector<2x32xbf16>
    %550 = arith.truncf %493 : vector<2x32xf32> to vector<2x32xbf16>
    %551 = tpu.concatenate %549, %550 in 1 : vector<2x32xbf16>, vector<2x32xbf16> -> vector<2x64xbf16>
    %cst_115 = arith.constant dense<0.000000e+00> : vector<2x128xf32>
    %552 = tpu.matmul %551, %5, %cst_115 {dimension_numbers = #tpu.dot_dimension_numbers<[1], [0], [0], [1], [0, 0, 1, 1], [], []>} : vector<2x64xbf16>, vector<64x128xbf16>, vector<2x128xf32> -> vector<2x128xf32>
    %553 = vector.broadcast %7 : vector<1x128xf32> to vector<2x128xf32>
    %554 = arith.addf %552, %553 : vector<2x128xf32>
    %555 = vector.extract_strided_slice %554 {offsets = [0, 0], sizes = [2, 32], strides = [1, 1]} : vector<2x128xf32> to vector<2x32xf32>
    %556 = arith.negf %555 : vector<2x32xf32>
    %557 = math.exp %556 : vector<2x32xf32>
    %cst_116 = arith.constant 1.000000e+00 : f32
    %558 = vector.broadcast %cst_116 : f32 to vector<2x32xf32>
    %559 = arith.addf %558, %557 : vector<2x32xf32>
    %560 = arith.divf %558, %559 : vector<2x32xf32>
    %561 = vector.extract_strided_slice %554 {offsets = [0, 32], sizes = [2, 32], strides = [1, 1]} : vector<2x128xf32> to vector<2x32xf32>
    %562 = arith.negf %561 : vector<2x32xf32>
    %563 = math.exp %562 : vector<2x32xf32>
    %cst_117 = arith.constant 1.000000e+00 : f32
    %564 = vector.broadcast %cst_117 : f32 to vector<2x32xf32>
    %565 = arith.addf %564, %563 : vector<2x32xf32>
    %566 = arith.divf %564, %565 : vector<2x32xf32>
    %567 = vector.extract_strided_slice %554 {offsets = [0, 64], sizes = [2, 32], strides = [1, 1]} : vector<2x128xf32> to vector<2x32xf32>
    %568 = math.tanh %567 : vector<2x32xf32>
    %569 = vector.extract_strided_slice %554 {offsets = [0, 96], sizes = [2, 32], strides = [1, 1]} : vector<2x128xf32> to vector<2x32xf32>
    %570 = arith.negf %569 : vector<2x32xf32>
    %571 = math.exp %570 : vector<2x32xf32>
    %cst_118 = arith.constant 1.000000e+00 : f32
    %572 = vector.broadcast %cst_118 : f32 to vector<2x32xf32>
    %573 = arith.addf %572, %571 : vector<2x32xf32>
    %574 = arith.divf %572, %573 : vector<2x32xf32>
    %575 = arith.mulf %566, %500 : vector<2x32xf32>
    %576 = arith.mulf %560, %568 : vector<2x32xf32>
    %577 = arith.addf %575, %576 : vector<2x32xf32>
    %578 = math.tanh %577 : vector<2x32xf32>
    %579 = arith.mulf %574, %578 : vector<2x32xf32>
    %c7_i32_119 = arith.constant 7 : i32
    %580 = arith.subi %c7_i32_119, %505 : i32
    %581 = vector.broadcast %580 : i32 to vector<2x1xi32>
    %582 = arith.cmpi sgt, %3, %581 : vector<2x1xi32>
    %583 = arith.extui %582 : vector<2x1xi1> to vector<2x1xi32>
    %584 = arith.sitofp %583 : vector<2x1xi32> to vector<2x1xf32>
    %585 = vector.broadcast %584 : vector<2x1xf32> to vector<2x32xf32>
    %586 = arith.mulf %585, %579 : vector<2x32xf32>
    %cst_120 = arith.constant 1.000000e+00 : f32
    %587 = vector.broadcast %cst_120 : f32 to vector<2x1xf32>
    %588 = arith.subf %587, %584 : vector<2x1xf32>
    %589 = vector.broadcast %588 : vector<2x1xf32> to vector<2x32xf32>
    %590 = arith.mulf %589, %493 : vector<2x32xf32>
    %591 = arith.addf %586, %590 : vector<2x32xf32>
    %592 = vector.broadcast %584 : vector<2x1xf32> to vector<2x32xf32>
    %593 = arith.mulf %592, %577 : vector<2x32xf32>
    %cst_121 = arith.constant 1.000000e+00 : f32
    %594 = vector.broadcast %cst_121 : f32 to vector<2x1xf32>
    %595 = arith.subf %594, %584 : vector<2x1xf32>
    %596 = vector.broadcast %595 : vector<2x1xf32> to vector<2x32xf32>
    %597 = arith.mulf %596, %500 : vector<2x32xf32>
    %598 = arith.addf %593, %597 : vector<2x32xf32>
    %599 = vector.broadcast %584 : vector<2x1xf32> to vector<2x32xf32>
    %600 = arith.mulf %599, %579 : vector<2x32xf32>
    %601 = arith.addf %503, %600 : vector<2x32xf32>
    %c6_i32 = arith.constant 6 : i32
    %c8_i32_122 = arith.constant 8 : i32
    %602 = arith.muli %arg1, %c8_i32_122 : i32
    %603 = arith.addi %602, %c6_i32 : i32
    %604 = arith.index_cast %c6_i32 : i32 to index
    %c0_123 = arith.constant 0 : index
    %c0_124 = arith.constant 0 : index
    %605 = vector.load %arg2[%604, %c0_123, %c0_124] : memref<8x2x32xbf16, #tpu.memory_space<vmem>>, vector<1x2x32xbf16>
    %606 = vector.shape_cast %605 : vector<1x2x32xbf16> to vector<2x32xbf16>
    %607 = arith.truncf %538 : vector<2x32xf32> to vector<2x32xbf16>
    %608 = tpu.concatenate %606, %607 in 1 : vector<2x32xbf16>, vector<2x32xbf16> -> vector<2x64xbf16>
    %cst_125 = arith.constant dense<0.000000e+00> : vector<2x128xf32>
    %609 = tpu.matmul %608, %4, %cst_125 {dimension_numbers = #tpu.dot_dimension_numbers<[1], [0], [0], [1], [0, 0, 1, 1], [], []>} : vector<2x64xbf16>, vector<64x128xbf16>, vector<2x128xf32> -> vector<2x128xf32>
    %610 = vector.broadcast %6 : vector<1x128xf32> to vector<2x128xf32>
    %611 = arith.addf %609, %610 : vector<2x128xf32>
    %612 = vector.extract_strided_slice %611 {offsets = [0, 0], sizes = [2, 32], strides = [1, 1]} : vector<2x128xf32> to vector<2x32xf32>
    %613 = arith.negf %612 : vector<2x32xf32>
    %614 = math.exp %613 : vector<2x32xf32>
    %cst_126 = arith.constant 1.000000e+00 : f32
    %615 = vector.broadcast %cst_126 : f32 to vector<2x32xf32>
    %616 = arith.addf %615, %614 : vector<2x32xf32>
    %617 = arith.divf %615, %616 : vector<2x32xf32>
    %618 = vector.extract_strided_slice %611 {offsets = [0, 32], sizes = [2, 32], strides = [1, 1]} : vector<2x128xf32> to vector<2x32xf32>
    %619 = arith.negf %618 : vector<2x32xf32>
    %620 = math.exp %619 : vector<2x32xf32>
    %cst_127 = arith.constant 1.000000e+00 : f32
    %621 = vector.broadcast %cst_127 : f32 to vector<2x32xf32>
    %622 = arith.addf %621, %620 : vector<2x32xf32>
    %623 = arith.divf %621, %622 : vector<2x32xf32>
    %624 = vector.extract_strided_slice %611 {offsets = [0, 64], sizes = [2, 32], strides = [1, 1]} : vector<2x128xf32> to vector<2x32xf32>
    %625 = math.tanh %624 : vector<2x32xf32>
    %626 = vector.extract_strided_slice %611 {offsets = [0, 96], sizes = [2, 32], strides = [1, 1]} : vector<2x128xf32> to vector<2x32xf32>
    %627 = arith.negf %626 : vector<2x32xf32>
    %628 = math.exp %627 : vector<2x32xf32>
    %cst_128 = arith.constant 1.000000e+00 : f32
    %629 = vector.broadcast %cst_128 : f32 to vector<2x32xf32>
    %630 = arith.addf %629, %628 : vector<2x32xf32>
    %631 = arith.divf %629, %630 : vector<2x32xf32>
    %632 = arith.mulf %623, %536 : vector<2x32xf32>
    %633 = arith.mulf %617, %625 : vector<2x32xf32>
    %634 = arith.addf %632, %633 : vector<2x32xf32>
    %635 = math.tanh %634 : vector<2x32xf32>
    %636 = arith.mulf %631, %635 : vector<2x32xf32>
    %637 = vector.broadcast %603 : i32 to vector<2x1xi32>
    %638 = arith.cmpi sgt, %3, %637 : vector<2x1xi32>
    %639 = arith.extui %638 : vector<2x1xi1> to vector<2x1xi32>
    %640 = arith.sitofp %639 : vector<2x1xi32> to vector<2x1xf32>
    %641 = vector.broadcast %640 : vector<2x1xf32> to vector<2x32xf32>
    %642 = arith.mulf %641, %636 : vector<2x32xf32>
    %643 = arith.addf %545, %642 : vector<2x32xf32>
    %c7_i32_129 = arith.constant 7 : i32
    %644 = arith.subi %c7_i32_129, %c6_i32 : i32
    %645 = arith.index_cast %644 : i32 to index
    %c0_130 = arith.constant 0 : index
    %c0_131 = arith.constant 0 : index
    %646 = vector.load %arg3[%645, %c0_130, %c0_131] : memref<8x2x32xbf16, #tpu.memory_space<vmem>>, vector<1x2x32xbf16>
    %647 = vector.shape_cast %646 : vector<1x2x32xbf16> to vector<2x32xbf16>
    %648 = arith.truncf %591 : vector<2x32xf32> to vector<2x32xbf16>
    %649 = tpu.concatenate %647, %648 in 1 : vector<2x32xbf16>, vector<2x32xbf16> -> vector<2x64xbf16>
    %cst_132 = arith.constant dense<0.000000e+00> : vector<2x128xf32>
    %650 = tpu.matmul %649, %5, %cst_132 {dimension_numbers = #tpu.dot_dimension_numbers<[1], [0], [0], [1], [0, 0, 1, 1], [], []>} : vector<2x64xbf16>, vector<64x128xbf16>, vector<2x128xf32> -> vector<2x128xf32>
    %651 = vector.broadcast %7 : vector<1x128xf32> to vector<2x128xf32>
    %652 = arith.addf %650, %651 : vector<2x128xf32>
    %653 = vector.extract_strided_slice %652 {offsets = [0, 0], sizes = [2, 32], strides = [1, 1]} : vector<2x128xf32> to vector<2x32xf32>
    %654 = arith.negf %653 : vector<2x32xf32>
    %655 = math.exp %654 : vector<2x32xf32>
    %cst_133 = arith.constant 1.000000e+00 : f32
    %656 = vector.broadcast %cst_133 : f32 to vector<2x32xf32>
    %657 = arith.addf %656, %655 : vector<2x32xf32>
    %658 = arith.divf %656, %657 : vector<2x32xf32>
    %659 = vector.extract_strided_slice %652 {offsets = [0, 32], sizes = [2, 32], strides = [1, 1]} : vector<2x128xf32> to vector<2x32xf32>
    %660 = arith.negf %659 : vector<2x32xf32>
    %661 = math.exp %660 : vector<2x32xf32>
    %cst_134 = arith.constant 1.000000e+00 : f32
    %662 = vector.broadcast %cst_134 : f32 to vector<2x32xf32>
    %663 = arith.addf %662, %661 : vector<2x32xf32>
    %664 = arith.divf %662, %663 : vector<2x32xf32>
    %665 = vector.extract_strided_slice %652 {offsets = [0, 64], sizes = [2, 32], strides = [1, 1]} : vector<2x128xf32> to vector<2x32xf32>
    %666 = math.tanh %665 : vector<2x32xf32>
    %667 = vector.extract_strided_slice %652 {offsets = [0, 96], sizes = [2, 32], strides = [1, 1]} : vector<2x128xf32> to vector<2x32xf32>
    %668 = arith.negf %667 : vector<2x32xf32>
    %669 = math.exp %668 : vector<2x32xf32>
    %cst_135 = arith.constant 1.000000e+00 : f32
    %670 = vector.broadcast %cst_135 : f32 to vector<2x32xf32>
    %671 = arith.addf %670, %669 : vector<2x32xf32>
    %672 = arith.divf %670, %671 : vector<2x32xf32>
    %673 = arith.mulf %664, %598 : vector<2x32xf32>
    %674 = arith.mulf %658, %666 : vector<2x32xf32>
    %675 = arith.addf %673, %674 : vector<2x32xf32>
    %676 = math.tanh %675 : vector<2x32xf32>
    %677 = arith.mulf %672, %676 : vector<2x32xf32>
    %c7_i32_136 = arith.constant 7 : i32
    %678 = arith.subi %c7_i32_136, %603 : i32
    %679 = vector.broadcast %678 : i32 to vector<2x1xi32>
    %680 = arith.cmpi sgt, %3, %679 : vector<2x1xi32>
    %681 = arith.extui %680 : vector<2x1xi1> to vector<2x1xi32>
    %682 = arith.sitofp %681 : vector<2x1xi32> to vector<2x1xf32>
    %683 = vector.broadcast %682 : vector<2x1xf32> to vector<2x32xf32>
    %684 = arith.mulf %683, %677 : vector<2x32xf32>
    %cst_137 = arith.constant 1.000000e+00 : f32
    %685 = vector.broadcast %cst_137 : f32 to vector<2x1xf32>
    %686 = arith.subf %685, %682 : vector<2x1xf32>
    %687 = vector.broadcast %686 : vector<2x1xf32> to vector<2x32xf32>
    %688 = arith.mulf %687, %591 : vector<2x32xf32>
    %689 = arith.addf %684, %688 : vector<2x32xf32>
    %690 = vector.broadcast %682 : vector<2x1xf32> to vector<2x32xf32>
    %691 = arith.mulf %690, %675 : vector<2x32xf32>
    %cst_138 = arith.constant 1.000000e+00 : f32
    %692 = vector.broadcast %cst_138 : f32 to vector<2x1xf32>
    %693 = arith.subf %692, %682 : vector<2x1xf32>
    %694 = vector.broadcast %693 : vector<2x1xf32> to vector<2x32xf32>
    %695 = arith.mulf %694, %598 : vector<2x32xf32>
    %696 = arith.addf %691, %695 : vector<2x32xf32>
    %697 = vector.broadcast %682 : vector<2x1xf32> to vector<2x32xf32>
    %698 = arith.mulf %697, %677 : vector<2x32xf32>
    %699 = arith.addf %601, %698 : vector<2x32xf32>
    %c7_i32_139 = arith.constant 7 : i32
    %c8_i32_140 = arith.constant 8 : i32
    %700 = arith.muli %arg1, %c8_i32_140 : i32
    %701 = arith.addi %700, %c7_i32_139 : i32
    %702 = arith.index_cast %c7_i32_139 : i32 to index
    %c0_141 = arith.constant 0 : index
    %c0_142 = arith.constant 0 : index
    %703 = vector.load %arg2[%702, %c0_141, %c0_142] : memref<8x2x32xbf16, #tpu.memory_space<vmem>>, vector<1x2x32xbf16>
    %704 = vector.shape_cast %703 : vector<1x2x32xbf16> to vector<2x32xbf16>
    %705 = arith.truncf %636 : vector<2x32xf32> to vector<2x32xbf16>
    %706 = tpu.concatenate %704, %705 in 1 : vector<2x32xbf16>, vector<2x32xbf16> -> vector<2x64xbf16>
    %cst_143 = arith.constant dense<0.000000e+00> : vector<2x128xf32>
    %707 = tpu.matmul %706, %4, %cst_143 {dimension_numbers = #tpu.dot_dimension_numbers<[1], [0], [0], [1], [0, 0, 1, 1], [], []>} : vector<2x64xbf16>, vector<64x128xbf16>, vector<2x128xf32> -> vector<2x128xf32>
    %708 = vector.broadcast %6 : vector<1x128xf32> to vector<2x128xf32>
    %709 = arith.addf %707, %708 : vector<2x128xf32>
    %710 = vector.extract_strided_slice %709 {offsets = [0, 0], sizes = [2, 32], strides = [1, 1]} : vector<2x128xf32> to vector<2x32xf32>
    %711 = arith.negf %710 : vector<2x32xf32>
    %712 = math.exp %711 : vector<2x32xf32>
    %cst_144 = arith.constant 1.000000e+00 : f32
    %713 = vector.broadcast %cst_144 : f32 to vector<2x32xf32>
    %714 = arith.addf %713, %712 : vector<2x32xf32>
    %715 = arith.divf %713, %714 : vector<2x32xf32>
    %716 = vector.extract_strided_slice %709 {offsets = [0, 32], sizes = [2, 32], strides = [1, 1]} : vector<2x128xf32> to vector<2x32xf32>
    %717 = arith.negf %716 : vector<2x32xf32>
    %718 = math.exp %717 : vector<2x32xf32>
    %cst_145 = arith.constant 1.000000e+00 : f32
    %719 = vector.broadcast %cst_145 : f32 to vector<2x32xf32>
    %720 = arith.addf %719, %718 : vector<2x32xf32>
    %721 = arith.divf %719, %720 : vector<2x32xf32>
    %722 = vector.extract_strided_slice %709 {offsets = [0, 64], sizes = [2, 32], strides = [1, 1]} : vector<2x128xf32> to vector<2x32xf32>
    %723 = math.tanh %722 : vector<2x32xf32>
    %724 = vector.extract_strided_slice %709 {offsets = [0, 96], sizes = [2, 32], strides = [1, 1]} : vector<2x128xf32> to vector<2x32xf32>
    %725 = arith.negf %724 : vector<2x32xf32>
    %726 = math.exp %725 : vector<2x32xf32>
    %cst_146 = arith.constant 1.000000e+00 : f32
    %727 = vector.broadcast %cst_146 : f32 to vector<2x32xf32>
    %728 = arith.addf %727, %726 : vector<2x32xf32>
    %729 = arith.divf %727, %728 : vector<2x32xf32>
    %730 = arith.mulf %721, %634 : vector<2x32xf32>
    %731 = arith.mulf %715, %723 : vector<2x32xf32>
    %732 = arith.addf %730, %731 : vector<2x32xf32>
    %733 = math.tanh %732 : vector<2x32xf32>
    %734 = arith.mulf %729, %733 : vector<2x32xf32>
    %735 = vector.broadcast %701 : i32 to vector<2x1xi32>
    %736 = arith.cmpi sgt, %3, %735 : vector<2x1xi32>
    %737 = arith.extui %736 : vector<2x1xi1> to vector<2x1xi32>
    %738 = arith.sitofp %737 : vector<2x1xi32> to vector<2x1xf32>
    %739 = vector.broadcast %738 : vector<2x1xf32> to vector<2x32xf32>
    %740 = arith.mulf %739, %734 : vector<2x32xf32>
    %741 = arith.addf %643, %740 : vector<2x32xf32>
    %c7_i32_147 = arith.constant 7 : i32
    %742 = arith.subi %c7_i32_147, %c7_i32_139 : i32
    %743 = arith.index_cast %742 : i32 to index
    %c0_148 = arith.constant 0 : index
    %c0_149 = arith.constant 0 : index
    %744 = vector.load %arg3[%743, %c0_148, %c0_149] : memref<8x2x32xbf16, #tpu.memory_space<vmem>>, vector<1x2x32xbf16>
    %745 = vector.shape_cast %744 : vector<1x2x32xbf16> to vector<2x32xbf16>
    %746 = arith.truncf %689 : vector<2x32xf32> to vector<2x32xbf16>
    %747 = tpu.concatenate %745, %746 in 1 : vector<2x32xbf16>, vector<2x32xbf16> -> vector<2x64xbf16>
    %cst_150 = arith.constant dense<0.000000e+00> : vector<2x128xf32>
    %748 = tpu.matmul %747, %5, %cst_150 {dimension_numbers = #tpu.dot_dimension_numbers<[1], [0], [0], [1], [0, 0, 1, 1], [], []>} : vector<2x64xbf16>, vector<64x128xbf16>, vector<2x128xf32> -> vector<2x128xf32>
    %749 = vector.broadcast %7 : vector<1x128xf32> to vector<2x128xf32>
    %750 = arith.addf %748, %749 : vector<2x128xf32>
    %751 = vector.extract_strided_slice %750 {offsets = [0, 0], sizes = [2, 32], strides = [1, 1]} : vector<2x128xf32> to vector<2x32xf32>
    %752 = arith.negf %751 : vector<2x32xf32>
    %753 = math.exp %752 : vector<2x32xf32>
    %cst_151 = arith.constant 1.000000e+00 : f32
    %754 = vector.broadcast %cst_151 : f32 to vector<2x32xf32>
    %755 = arith.addf %754, %753 : vector<2x32xf32>
    %756 = arith.divf %754, %755 : vector<2x32xf32>
    %757 = vector.extract_strided_slice %750 {offsets = [0, 32], sizes = [2, 32], strides = [1, 1]} : vector<2x128xf32> to vector<2x32xf32>
    %758 = arith.negf %757 : vector<2x32xf32>
    %759 = math.exp %758 : vector<2x32xf32>
    %cst_152 = arith.constant 1.000000e+00 : f32
    %760 = vector.broadcast %cst_152 : f32 to vector<2x32xf32>
    %761 = arith.addf %760, %759 : vector<2x32xf32>
    %762 = arith.divf %760, %761 : vector<2x32xf32>
    %763 = vector.extract_strided_slice %750 {offsets = [0, 64], sizes = [2, 32], strides = [1, 1]} : vector<2x128xf32> to vector<2x32xf32>
    %764 = math.tanh %763 : vector<2x32xf32>
    %765 = vector.extract_strided_slice %750 {offsets = [0, 96], sizes = [2, 32], strides = [1, 1]} : vector<2x128xf32> to vector<2x32xf32>
    %766 = arith.negf %765 : vector<2x32xf32>
    %767 = math.exp %766 : vector<2x32xf32>
    %cst_153 = arith.constant 1.000000e+00 : f32
    %768 = vector.broadcast %cst_153 : f32 to vector<2x32xf32>
    %769 = arith.addf %768, %767 : vector<2x32xf32>
    %770 = arith.divf %768, %769 : vector<2x32xf32>
    %771 = arith.mulf %762, %696 : vector<2x32xf32>
    %772 = arith.mulf %756, %764 : vector<2x32xf32>
    %773 = arith.addf %771, %772 : vector<2x32xf32>
    %774 = math.tanh %773 : vector<2x32xf32>
    %775 = arith.mulf %770, %774 : vector<2x32xf32>
    %c7_i32_154 = arith.constant 7 : i32
    %776 = arith.subi %c7_i32_154, %701 : i32
    %777 = vector.broadcast %776 : i32 to vector<2x1xi32>
    %778 = arith.cmpi sgt, %3, %777 : vector<2x1xi32>
    %779 = arith.extui %778 : vector<2x1xi1> to vector<2x1xi32>
    %780 = arith.sitofp %779 : vector<2x1xi32> to vector<2x1xf32>
    %781 = vector.broadcast %780 : vector<2x1xf32> to vector<2x32xf32>
    %782 = arith.mulf %781, %775 : vector<2x32xf32>
    %cst_155 = arith.constant 1.000000e+00 : f32
    %783 = vector.broadcast %cst_155 : f32 to vector<2x1xf32>
    %784 = arith.subf %783, %780 : vector<2x1xf32>
    %785 = vector.broadcast %784 : vector<2x1xf32> to vector<2x32xf32>
    %786 = arith.mulf %785, %689 : vector<2x32xf32>
    %787 = arith.addf %782, %786 : vector<2x32xf32>
    %788 = vector.broadcast %780 : vector<2x1xf32> to vector<2x32xf32>
    %789 = arith.mulf %788, %773 : vector<2x32xf32>
    %cst_156 = arith.constant 1.000000e+00 : f32
    %790 = vector.broadcast %cst_156 : f32 to vector<2x1xf32>
    %791 = arith.subf %790, %780 : vector<2x1xf32>
    %792 = vector.broadcast %791 : vector<2x1xf32> to vector<2x32xf32>
    %793 = arith.mulf %792, %696 : vector<2x32xf32>
    %794 = arith.addf %789, %793 : vector<2x32xf32>
    %795 = vector.broadcast %780 : vector<2x1xf32> to vector<2x32xf32>
    %796 = arith.mulf %795, %775 : vector<2x32xf32>
    %797 = arith.addf %699, %796 : vector<2x32xf32>
    %c8_i32_157 = arith.constant 8 : i32
    %c0_158 = arith.constant 0 : index
    %c0_159 = arith.constant 0 : index
    %798 = vector.load %arg10[%c0_158, %c0_159] : memref<2x32xf32, #tpu.memory_space<vmem>>, vector<2x32xf32>
    tpu.vector_store %arg10[%c0_158, %c0_159], %734 {strides = array<i32>} : memref<2x32xf32, #tpu.memory_space<vmem>>, vector<2x32xf32>,
    %c0_160 = arith.constant 0 : index
    %c0_161 = arith.constant 0 : index
    %799 = vector.load %arg11[%c0_160, %c0_161] : memref<2x32xf32, #tpu.memory_space<vmem>>, vector<2x32xf32>
    tpu.vector_store %arg11[%c0_160, %c0_161], %732 {strides = array<i32>} : memref<2x32xf32, #tpu.memory_space<vmem>>, vector<2x32xf32>,
    %c0_162 = arith.constant 0 : index
    %c0_163 = arith.constant 0 : index
    %800 = vector.load %arg12[%c0_162, %c0_163] : memref<2x32xf32, #tpu.memory_space<vmem>>, vector<2x32xf32>
    tpu.vector_store %arg12[%c0_162, %c0_163], %787 {strides = array<i32>} : memref<2x32xf32, #tpu.memory_space<vmem>>, vector<2x32xf32>,
    %c0_164 = arith.constant 0 : index
    %c0_165 = arith.constant 0 : index
    %801 = vector.load %arg13[%c0_164, %c0_165] : memref<2x32xf32, #tpu.memory_space<vmem>>, vector<2x32xf32>
    tpu.vector_store %arg13[%c0_164, %c0_165], %794 {strides = array<i32>} : memref<2x32xf32, #tpu.memory_space<vmem>>, vector<2x32xf32>,
    %c0_166 = arith.constant 0 : index
    %c0_167 = arith.constant 0 : index
    %802 = vector.load %arg14[%c0_166, %c0_167] : memref<2x32xf32, #tpu.memory_space<vmem>>, vector<2x32xf32>
    tpu.vector_store %arg14[%c0_166, %c0_167], %741 {strides = array<i32>} : memref<2x32xf32, #tpu.memory_space<vmem>>, vector<2x32xf32>,
    %c0_168 = arith.constant 0 : index
    %c0_169 = arith.constant 0 : index
    %803 = vector.load %arg15[%c0_168, %c0_169] : memref<2x32xf32, #tpu.memory_space<vmem>>, vector<2x32xf32>
    tpu.vector_store %arg15[%c0_168, %c0_169], %797 {strides = array<i32>} : memref<2x32xf32, #tpu.memory_space<vmem>>, vector<2x32xf32>,
    %c0_i32_170 = arith.constant 0 : i32
    %804 = arith.cmpi eq, %arg1, %c0_i32_170 : i32
    %805 = arith.extui %804 : i1 to i32
    %c0_i32_171 = arith.constant 0 : i32
    %806 = arith.cmpi ne, %805, %c0_i32_171 : i32
    scf.if %806 {
      %c0_172 = arith.constant 0 : index
      %c0_173 = arith.constant 0 : index
      %807 = vector.load %arg14[%c0_172, %c0_173] : memref<2x32xf32, #tpu.memory_space<vmem>>, vector<2x32xf32>
      %c0_174 = arith.constant 0 : index
      %c0_175 = arith.constant 0 : index
      %808 = vector.load %arg15[%c0_174, %c0_175] : memref<2x32xf32, #tpu.memory_space<vmem>>, vector<2x32xf32>
      %809 = tpu.concatenate %807, %808 in 1 : vector<2x32xf32>, vector<2x32xf32> -> vector<2x64xf32>
      %c0_176 = arith.constant 0 : index
      %c0_177 = arith.constant 0 : index
      %810 = vector.load %arg9[%c0_176, %c0_177] : memref<2x64xf32, #tpu.memory_space<vmem>>, vector<2x64xf32>
      tpu.vector_store %arg9[%c0_176, %c0_177], %809 {strides = array<i32>} : memref<2x64xf32, #tpu.memory_space<vmem>>, vector<2x64xf32>,
    } else {
    }
    return
  }
  func.func @transform_0(%arg0: i32, %arg1: i32) -> (i32, i32, i32) {
    %c0_i32 = arith.constant 0 : i32
    %c0_i32_0 = arith.constant 0 : i32
    return %arg1, %arg0, %c0_i32 : i32, i32, i32
  }
  func.func @transform_1(%arg0: i32, %arg1: i32) -> (i32, i32, i32) {
    %c0_i32 = arith.constant 0 : i32
    %0 = arith.subi %c0_i32, %arg1 : i32
    %c0_i32_0 = arith.constant 0 : i32
    %c0_i32_1 = arith.constant 0 : i32
    return %0, %arg0, %c0_i32_0 : i32, i32, i32
  }
  func.func @transform_2(%arg0: i32, %arg1: i32) -> (i32, i32) {
    %c0_i32 = arith.constant 0 : i32
    %c0_i32_0 = arith.constant 0 : i32
    return %arg0, %c0_i32 : i32, i32
  }
  func.func @transform_3(%arg0: i32, %arg1: i32) -> (i32, i32) {
    %c0_i32 = arith.constant 0 : i32
    %c0_i32_0 = arith.constant 0 : i32
    %c0_i32_1 = arith.constant 0 : i32
    return %c0_i32, %c0_i32_0 : i32, i32
  }
  func.func @transform_4(%arg0: i32, %arg1: i32) -> (i32, i32) {
    %c0_i32 = arith.constant 0 : i32
    %c0_i32_0 = arith.constant 0 : i32
    %c0_i32_1 = arith.constant 0 : i32
    return %c0_i32, %c0_i32_0 : i32, i32
  }
  func.func @transform_5(%arg0: i32, %arg1: i32) -> (i32, i32) {
    %c0_i32 = arith.constant 0 : i32
    %c0_i32_0 = arith.constant 0 : i32
    %c0_i32_1 = arith.constant 0 : i32
    return %c0_i32, %c0_i32_0 : i32, i32
  }
  func.func @transform_6(%arg0: i32, %arg1: i32) -> (i32, i32) {
    %c0_i32 = arith.constant 0 : i32
    %c0_i32_0 = arith.constant 0 : i32
    %c0_i32_1 = arith.constant 0 : i32
    return %c0_i32, %c0_i32_0 : i32, i32
  }
  func.func @transform_7(%arg0: i32, %arg1: i32) -> (i32, i32) {
    %c0_i32 = arith.constant 0 : i32
    %c0_i32_0 = arith.constant 0 : i32
    return %arg0, %c0_i32 : i32, i32
  }
}

</mosaic_0001>

<llo_original>
// kernel: tpu_custom_call.1
$region0: #{tpu_custom_call.1}
  #allocation0 [shape = 'u32[]', space=smem, size = 0x4, offset = 0x4, fixed_abs, tag = 'smem constant byte address 0x4 - core index']
  #allocation1 [shape = 'u32[144,128]{1,0:T(1,128)}', space=vmem, size = 0x12000, scoped, tag = 'internal scratch']
  #allocation2 [shape = 'f32[2,32]{1,0:T(2,128)}', space=vmem, size = 0x400, scoped, tag = 'scratch operand']
  #allocation3 [shape = 'f32[2,32]{1,0:T(2,128)}', space=vmem, size = 0x400, scoped, tag = 'scratch operand']
  #allocation4 [shape = 'f32[2,32]{1,0:T(2,128)}', space=vmem, size = 0x400, scoped, tag = 'scratch operand']
  #allocation5 [shape = 'f32[2,32]{1,0:T(2,128)}', space=vmem, size = 0x400, scoped, tag = 'scratch operand']
  #allocation6 [shape = 'f32[2,32]{1,0:T(2,128)}', space=vmem, size = 0x400, scoped, tag = 'scratch operand']
  #allocation7 [shape = 'f32[2,32]{1,0:T(2,128)}', space=vmem, size = 0x400, scoped, tag = 'scratch operand']
  %s0 = inlined_call_operand.hbm [shape: bf16[8,2,32], index: 0, kind: input, shape index: {}]
  %s1 = inlined_call_operand.hbm [shape: bf16[8,2,32], index: 1, kind: input, shape index: {}]
  %s2 = inlined_call_operand.vmem [shape: s32[2,1], index: 2, kind: input, shape index: {}]
  %s3 = inlined_call_operand.hbm [shape: bf16[64,128], index: 3, kind: input, shape index: {}]
  %s4 = inlined_call_operand.vmem [shape: f32[1,128], index: 4, kind: input, shape index: {}]
  %s5 = inlined_call_operand.hbm [shape: bf16[64,128], index: 5, kind: input, shape index: {}]
  %s6 = inlined_call_operand.vmem [shape: f32[1,128], index: 6, kind: input, shape index: {}]
  %s7 = inlined_call_operand.hbm [shape: f32[2,64], index: 7, kind: output, shape index: {}]
  %s8 = sld [smem:[#allocation0]]
  $region62: #{tpu_custom_call.1} parent=0
    _
  %s10 = ssub.s32 1, %s8
  %s11 = scalar_select 0, %s10, %s8
  $region1: #{tpu_custom_call.1} parent=0
    #allocation8 [shape = 'u8[4096]{0}', space=vmem, size = 0x1000, scoped, tag = 'input window, operand 0, single buffered']
    #allocation9 [shape = 's32[1]{0}', space=sflag, size = 0x4, scoped, tag = 'scoped memory for tpu_custom_call.1']
    #allocation10 [shape = 's32[1]{0}', space=sflag, size = 0x4, scoped, tag = 'scoped memory for tpu_custom_call.1']
    #allocation11 [shape = 'u8[4096]{0}', space=vmem, size = 0x1000, scoped, tag = 'input window, operand 1, single buffered']
    #allocation12 [shape = 's32[1]{0}', space=sflag, size = 0x4, scoped, tag = 'scoped memory for tpu_custom_call.1']
    #allocation13 [shape = 'u8[16384]{0}', space=vmem, size = 0x4000, scoped, tag = 'input window, operand 3, single buffered']
    #allocation14 [shape = 'u8[16384]{0}', space=vmem, size = 0x4000, scoped, tag = 'input window, operand 5, single buffered']
    #allocation15 [shape = 's32[1]{0}', space=sflag, size = 0x4, scoped, tag = 'scoped memory for tpu_custom_call.1']
    #allocation16 [shape = 'u8[1024]{0}', space=vmem, size = 0x400, scoped, tag = 'output window, operand 0, single buffered']
    %12 = vsyncpa [#allocation9], 0
    %13 = vsyncpa [#allocation12], 0
    %14 = vsyncpa [#allocation15], 0
    %15 = vsyncpa [#allocation10], 0
    // Predicated region
    $region2: #{tpu_custom_call.1} parent=1 // pred_check
      _
    $region3: #{tpu_custom_call.1} parent=1 // pred_check_branch
      %17 = sbr.rel (0) target = $region5
    $region4: #{tpu_custom_call.1} parent=1 // pred_region
      %s19 = ssub.s32 128, 128
      %20 = vsyncadd [#allocation9], %s19
      %s21 = sshll.u32 [#allocation8], 4
      %s22 = int_to_ptr.vmem [resolvable:$true] %s21
      %27 = dma.hbm_to_vmem [thread:$0]  %s0, 128, %s22, [#allocation9], 16, 16, 1
    $region5: #{tpu_custom_call.1} parent=1 // pred_fallthru
      _
    // Predicated region
    $region6: #{tpu_custom_call.1} parent=1 // pred_check
      _
    $region7: #{tpu_custom_call.1} parent=1 // pred_check_branch
      %29 = sbr.rel (0) target = $region9
    $region8: #{tpu_custom_call.1} parent=1 // pred_region
      %s30 = ssub.s32 0, 0
      %s31 = smul.u32 8, %s30
      %s33 = ssub.s32 128, 128
      %34 = vsyncadd [#allocation12], %s33
      %s35 = smul.addr %s31, 16
      %s36 = scalar_lea.hbm %s1, %s35
      %s37 = sshll.u32 [#allocation11], 4
      %s38 = int_to_ptr.vmem [resolvable:$true] %s37
      %43 = dma.hbm_to_vmem [thread:$0]  %s36, 128, %s38, [#allocation12], 16, 16, 1
    $region9: #{tpu_custom_call.1} parent=1 // pred_fallthru
      _
    // Predicated region
    $region10: #{tpu_custom_call.1} parent=1 // pred_check
      _
    $region11: #{tpu_custom_call.1} parent=1 // pred_check_branch
      %45 = sbr.rel (0) target = $region13
    $region12: #{tpu_custom_call.1} parent=1 // pred_region
      _
    $region13: #{tpu_custom_call.1} parent=1 // pred_fallthru
      _
    // Predicated region
    $region14: #{tpu_custom_call.1} parent=1 // pred_check
      _
    $region15: #{tpu_custom_call.1} parent=1 // pred_check_branch
      %47 = sbr.rel (0) target = $region17
    $region16: #{tpu_custom_call.1} parent=1 // pred_region
      %s49 = ssub.s32 512, 512
      %50 = vsyncadd [#allocation12], %s49
      %s51 = sshll.u32 [#allocation13], 4
      %s52 = int_to_ptr.vmem [resolvable:$true] %s51
      %57 = dma.hbm_to_vmem [thread:$0]  %s3, 512, %s52, [#allocation12], 64, 64, 4
    $region17: #{tpu_custom_call.1} parent=1 // pred_fallthru
      _
    // Predicated region
    $region18: #{tpu_custom_call.1} parent=1 // pred_check
      _
    $region19: #{tpu_custom_call.1} parent=1 // pred_check_branch
      %59 = sbr.rel (0) target = $region21
    $region20: #{tpu_custom_call.1} parent=1 // pred_region
      _
    $region21: #{tpu_custom_call.1} parent=1 // pred_fallthru
      _
    // Predicated region
    $region22: #{tpu_custom_call.1} parent=1 // pred_check
      _
    $region23: #{tpu_custom_call.1} parent=1 // pred_check_branch
      %61 = sbr.rel (0) target = $region25
    $region24: #{tpu_custom_call.1} parent=1 // pred_region
      %s63 = ssub.s32 512, 512
      %64 = vsyncadd [#allocation15], %s63
      %s65 = sshll.u32 [#allocation14], 4
      %s66 = int_to_ptr.vmem [resolvable:$true] %s65
      %71 = dma.hbm_to_vmem [thread:$0]  %s5, 512, %s66, [#allocation15], 64, 64, 4
    $region25: #{tpu_custom_call.1} parent=1 // pred_fallthru
      _
    // Predicated region
    $region26: #{tpu_custom_call.1} parent=1 // pred_check
      _
    $region27: #{tpu_custom_call.1} parent=1 // pred_check_branch
      %73 = sbr.rel (0) target = $region29
    $region28: #{tpu_custom_call.1} parent=1 // pred_region
      _
    $region29: #{tpu_custom_call.1} parent=1 // pred_fallthru
      _
    // Predicated region
    $region30: #{tpu_custom_call.1} parent=1 // pred_check
      _
    $region31: #{tpu_custom_call.1} parent=1 // pred_check_branch
      %75 = sbr.rel (0) target = $region33
    $region32: #{tpu_custom_call.1} parent=1 // pred_region
      %76 = dma.done [#allocation9], 128
    $region33: #{tpu_custom_call.1} parent=1 // pred_fallthru
      _
    // Predicated region
    $region34: #{tpu_custom_call.1} parent=1 // pred_check
      _
    $region35: #{tpu_custom_call.1} parent=1 // pred_check_branch
      %78 = sbr.rel (0) target = $region37
    $region36: #{tpu_custom_call.1} parent=1 // pred_region
      %79 = dma.done [#allocation12], 128
    $region37: #{tpu_custom_call.1} parent=1 // pred_fallthru
      _
    // Predicated region
    $region38: #{tpu_custom_call.1} parent=1 // pred_check
      _
    $region39: #{tpu_custom_call.1} parent=1 // pred_check_branch
      %81 = sbr.rel (0) target = $region41
    $region40: #{tpu_custom_call.1} parent=1 // pred_region
      %82 = dma.done [#allocation12], 512
    $region41: #{tpu_custom_call.1} parent=1 // pred_fallthru
      _
    // Predicated region
    $region42: #{tpu_custom_call.1} parent=1 // pred_check
      _
    $region43: #{tpu_custom_call.1} parent=1 // pred_check_branch
      %84 = sbr.rel (0) target = $region45
    $region44: #{tpu_custom_call.1} parent=1 // pred_region
      %85 = dma.done [#allocation15], 512
    $region45: #{tpu_custom_call.1} parent=1 // pred_fallthru
      _
    %s86 = ssub.s32 0, 0
    %s87 = smul.u32 8, %s86
    %p89 = scmp.eq.s32.totalorder 0, 0
    // Predicated region
    $region46: #{tpu_custom_call.1} parent=1 // pred_check
      %p90 = pneg %p89
    $region47: #{tpu_custom_call.1} parent=1 // pred_check_branch
      %92 = sbr.rel (%p90) target = $region49
    $region48: #{tpu_custom_call.1} parent=1 // pred_region
      %vm93 = vcmask 254976
      %94 = vst.msk [vmem:[#allocation2] sm:$0x3] %vm93, 0.0
      %95 = vst.msk [vmem:[#allocation3] sm:$0x3] %vm93, 0.0
      %96 = vst.msk [vmem:[#allocation4] sm:$0x3] %vm93, 0.0
      %97 = vst.msk [vmem:[#allocation5] sm:$0x3] %vm93, 0.0
      %98 = vst.msk [vmem:[#allocation6] sm:$0x3] %vm93, 0.0
      %99 = vst.msk [vmem:[#allocation7] sm:$0x3] %vm93, 0.0
    $region49: #{tpu_custom_call.1} parent=1 // pred_fallthru
      _
    %v100 = vld [vmem:[%s2] sm:$0x3]
    %v101 = vld [vmem:[#allocation13] sm:$0xf]
    %v102 = vld [vmem:[#allocation13 + $0x4] sm:$0xf]
    %v103 = vld [vmem:[#allocation13 + $0x8] sm:$0xf]
    %v104 = vld [vmem:[#allocation13 + $0xc] sm:$0xf]
    %v105 = vld [vmem:[#allocation13 + $0x10] sm:$0xf]
    %v106 = vld [vmem:[#allocation13 + $0x14] sm:$0xf]
    %v107 = vld [vmem:[#allocation13 + $0x18] sm:$0xf]
    %v108 = vld [vmem:[#allocation13 + $0x1c] sm:$0xf]
    %v109 = vld [vmem:[#allocation14] sm:$0xf]
    %v110 = vld [vmem:[#allocation14 + $0x4] sm:$0xf]
    %v111 = vld [vmem:[#allocation14 + $0x8] sm:$0xf]
    %v112 = vld [vmem:[#allocation14 + $0xc] sm:$0xf]
    %v113 = vld [vmem:[#allocation14 + $0x10] sm:$0xf]
    %v114 = vld [vmem:[#allocation14 + $0x14] sm:$0xf]
    %v115 = vld [vmem:[#allocation14 + $0x18] sm:$0xf]
    %v116 = vld [vmem:[#allocation14 + $0x1c] sm:$0xf]
    %v117 = vld [vmem:[%s4] sm:$0x1]
    %v118 = vld [vmem:[%s6] sm:$0x1]
    %v119 = vld [vmem:[#allocation2] sm:$0x3]
    %v120 = vld [vmem:[#allocation3] sm:$0x3]
    %v121 = vld [vmem:[#allocation4] sm:$0x3]
    %v122 = vld [vmem:[#allocation5] sm:$0x3]
    %v123 = vld [vmem:[#allocation6] sm:$0x3]
    %v124 = vld [vmem:[#allocation7] sm:$0x3]
    %s125 = smul.u32 0, 8
    %v126 = vld [vmem:[#allocation8] sm:$0x1]
    %v127 = vpack.c.bf16 %v119, %v119
    %129 = vrot.lane.b32.xlu0 %v127, 32
    %v130 = vpop.permute.xlu0 %129
    %vm131 = vcmask 261120
    %v134 = vsel %vm131, %v126, %v130
    %v136 = vlaneseq
    %v137 = vshrl.u32 %v136, 7
    %v138 = vsub.s32 0, %v137
    %v139 = vrot.slane %v117, %v138
    %v149 = vunpack.c.l.b16 %v101
    %v150 = vunpack.c.l.b16 %v102
    %v151 = vunpack.c.l.b16 %v103
    %v152 = vunpack.c.l.b16 %v104
    %v153 = vunpack.c.l.b16 %v105
    %v154 = vunpack.c.l.b16 %v106
    %v155 = vunpack.c.l.b16 %v107
    %v156 = vunpack.c.l.b16 %v108
    %v157 = vpack.c.b16 %v150, %v149
    %v158 = vpack.c.b16 %v152, %v151
    %v159 = vpack.c.b16 %v154, %v153
    %v160 = vpack.c.b16 %v156, %v155
    %vm165 = vcmask 523264
    %v166 = vsel %vm165, %v134, 0
    %168 = vmatprep.subr.bf16.mxu0 0
    %169 = vmatpush1.bf16.msra.mxu0 %v157
    %170 = vmatprep.subr.bf16.mxu0 0
    %171 = vmatpush1.bf16.msra.mxu0 %v158
    %172 = vmatprep.subr.bf16.mxu0 0
    %173 = vmatpush1.bf16.msra.mxu0 %v159
    %174 = vmatprep.subr.bf16.mxu0 0
    %175 = vmatpush1.bf16.msra.mxu0 %v160
    %176 = vmatprep.subr.bf16.mxu0 0
    %177 = vmatpush1.bf16.msra.mxu0 0
    %178 = vmatprep.subr.bf16.mxu0 0
    %179 = vmatpush1.bf16.msra.mxu0 0
    %180 = vmatprep.subr.bf16.mxu0 0
    %181 = vmatpush1.bf16.msra.mxu0 0
    %182 = vmatprep.subr.bf16.mxu0 0
    %183 = vmatpush1.bf16.msra.mxu0 0
    %184 = vmatprep.subr.bf16.mxu0 0
    %185 = vmatpush1.bf16.msra.mxu0 0
    %186 = vmatprep.subr.bf16.mxu0 0
    %187 = vmatpush1.bf16.msra.mxu0 0
    %188 = vmatprep.subr.bf16.mxu0 0
    %189 = vmatpush1.bf16.msra.mxu0 0
    %190 = vmatprep.subr.bf16.mxu0 0
    %191 = vmatpush1.bf16.msra.mxu0 0
    %192 = vmatprep.subr.bf16.mxu0 0
    %193 = vmatpush1.bf16.msra.mxu0 0
    %194 = vmatprep.subr.bf16.mxu0 0
    %195 = vmatpush1.bf16.msra.mxu0 0
    %196 = vmatprep.subr.bf16.mxu0 0
    %197 = vmatpush1.bf16.msra.mxu0 0
    %198 = vmatprep.subr.bf16.mxu0 0
    %199 = vmatpush1.bf16.msra.mxu0 0
    %200 = vmatprep.mubr.bf16.mxu0 0
    %201 = vmatmul.mubr.bf16.gmra.mrb[0].mxu0 %v166
    %v202 = vpop.f32.mrb[0].mxu0
    %v203 = vadd.f32 %v139, %v202
    %v204 = vpop.f32.mrb[0].mxu0
    %v205 = vpop.f32.mrb[0].mxu0
    %v206 = vpop.f32.mrb[0].mxu0
    %207 = vdwg.mxu0
    %v208 = vxor.u32 %v203, 2147483648
    %v209 = vmul.f32 %v208, 1.442695
    %v210 = vpow.pop %v209
    %v211 = vadd.f32 %v210, 1.0
    %v212 = vrcp.pop %v211
    %v213 = vmul.f32 1.0, %v212
    %v214 = vtanh.pop %v203
    %216 = vrot.lane.b32.xlu0 %v120, 32
    %v217 = vpop.permute.xlu0 %216
    %v219 = vmul.f32 %v213, %v217
    %221 = vrot.lane.b32.xlu0 %v214, 64
    %v222 = vpop.permute.xlu0 %221
    %v224 = vmul.f32 %v213, %v222
    %226 = vrot.lane.b32.xlu0 %v224, 32
    %v227 = vpop.permute.xlu0 %226
    %v229 = vadd.f32 %v219, %v227
    %v230 = vtanh.pop %v229
    %232 = vrot.lane.b32.xlu0 %v230, 64
    %v233 = vpop.permute.xlu0 %232
    %v235 = vmul.f32 %v213, %v233
    %v236 = vstv %s125
    %vm237 = vcmp.gt.s32.totalorder %v100, %v236
    %v238 = vsel %vm237, 1, 0
    %v239 = vcvt.s32.f32 %v238
    %241 = vset.pattern.permute.xlu0 0
    %242 = vperm.xlu0 %241, %v239
    %v243 = vpop.permute.xlu0 %242
    %v245 = vmul.f32 %v243, %v235
    %247 = vrot.lane.b32.xlu0 %v245, 32
    %v248 = vpop.permute.xlu0 %247
    %v250 = vadd.f32 %v123, %v248
    %s251 = scalar_lea.vmem [#allocation11], 7
    %v252 = vld [vmem:[%s251] sm:$0x1]
    %v253 = vpack.c.bf16 %v121, %v121
    %255 = vrot.lane.b32.xlu0 %v253, 32
    %v256 = vpop.permute.xlu0 %255
    %v259 = vsel %vm131, %v252, %v256
    %v261 = vlaneseq
    %v262 = vshrl.u32 %v261, 7
    %v263 = vsub.s32 0, %v262
    %v264 = vrot.slane %v118, %v263
    %v274 = vunpack.c.l.b16 %v109
    %v275 = vunpack.c.l.b16 %v110
    %v276 = vunpack.c.l.b16 %v111
    %v277 = vunpack.c.l.b16 %v112
    %v278 = vunpack.c.l.b16 %v113
    %v279 = vunpack.c.l.b16 %v114
    %v280 = vunpack.c.l.b16 %v115
    %v281 = vunpack.c.l.b16 %v116
    %v282 = vpack.c.b16 %v275, %v274
    %v283 = vpack.c.b16 %v277, %v276
    %v284 = vpack.c.b16 %v279, %v278
    %v285 = vpack.c.b16 %v281, %v280
    %v290 = vsel %vm165, %v259, 0
    %292 = vmatprep.subr.bf16.mxu0 0
    %293 = vmatpush1.bf16.msra.mxu0 %v282
    %294 = vmatprep.subr.bf16.mxu0 0
    %295 = vmatpush1.bf16.msra.mxu0 %v283
    %296 = vmatprep.subr.bf16.mxu0 0
    %297 = vmatpush1.bf16.msra.mxu0 %v284
    %298 = vmatprep.subr.bf16.mxu0 0
    %299 = vmatpush1.bf16.msra.mxu0 %v285
    %300 = vmatprep.subr.bf16.mxu0 0
    %301 = vmatpush1.bf16.msra.mxu0 0
    %302 = vmatprep.subr.bf16.mxu0 0
    %303 = vmatpush1.bf16.msra.mxu0 0
    %304 = vmatprep.subr.bf16.mxu0 0
    %305 = vmatpush1.bf16.msra.mxu0 0
    %306 = vmatprep.subr.bf16.mxu0 0
    %307 = vmatpush1.bf16.msra.mxu0 0
    %308 = vmatprep.subr.bf16.mxu0 0
    %309 = vmatpush1.bf16.msra.mxu0 0
    %310 = vmatprep.subr.bf16.mxu0 0
    %311 = vmatpush1.bf16.msra.mxu0 0
    %312 = vmatprep.subr.bf16.mxu0 0
    %313 = vmatpush1.bf16.msra.mxu0 0
    %314 = vmatprep.subr.bf16.mxu0 0
    %315 = vmatpush1.bf16.msra.mxu0 0
    %316 = vmatprep.subr.bf16.mxu0 0
    %317 = vmatpush1.bf16.msra.mxu0 0
    %318 = vmatprep.subr.bf16.mxu0 0
    %319 = vmatpush1.bf16.msra.mxu0 0
    %320 = vmatprep.subr.bf16.mxu0 0
    %321 = vmatpush1.bf16.msra.mxu0 0
    %322 = vmatprep.subr.bf16.mxu0 0
    %323 = vmatpush1.bf16.msra.mxu0 0
    %324 = vmatprep.mubr.bf16.mxu0 0
    %325 = vmatmul.mubr.bf16.gmra.mrb[0].mxu0 %v290
    %v326 = vpop.f32.mrb[0].mxu0
    %v327 = vadd.f32 %v264, %v326
    %v328 = vpop.f32.mrb[0].mxu0
    %v329 = vpop.f32.mrb[0].mxu0
    %v330 = vpop.f32.mrb[0].mxu0
    %331 = vdwg.mxu0
    %v332 = vxor.u32 %v327, 2147483648
    %v333 = vmul.f32 %v332, 1.442695
    %v334 = vpow.pop %v333
    %v335 = vadd.f32 %v334, 1.0
    %v336 = vrcp.pop %v335
    %v337 = vmul.f32 1.0, %v336
    %v338 = vtanh.pop %v327
    %340 = vrot.lane.b32.xlu0 %v122, 32
    %v341 = vpop.permute.xlu0 %340
    %v343 = vmul.f32 %v337, %v341
    %345 = vrot.lane.b32.xlu0 %v338, 64
    %v346 = vpop.permute.xlu0 %345
    %v348 = vmul.f32 %v337, %v346
    %350 = vrot.lane.b32.xlu0 %v348, 32
    %v351 = vpop.permute.xlu0 %350
    %v353 = vadd.f32 %v343, %v351
    %v354 = vtanh.pop %v353
    %356 = vrot.lane.b32.xlu0 %v354, 64
    %v357 = vpop.permute.xlu0 %356
    %v359 = vmul.f32 %v337, %v357
    %s360 = ssub.s32 7, %s125
    %v361 = vstv %s360
    %vm362 = vcmp.gt.s32.totalorder %v100, %v361
    %v363 = vsel %vm362, 1, 0
    %v364 = vcvt.s32.f32 %v363
    %366 = vset.pattern.permute.xlu0 0
    %367 = vperm.xlu0 %366, %v364
    %v368 = vpop.permute.xlu0 %367
    %v370 = vmul.f32 %v368, %v359
    %v371 = vsub.f32 1.0, %v364
    %373 = vset.pattern.permute.xlu0 0
    %374 = vperm.xlu0 %373, %v371
    %v375 = vpop.permute.xlu0 %374
    %v377 = vmul.f32 %v375, %v121
    %379 = vrot.lane.b32.xlu0 %v377, 96
    %v380 = vpop.permute.xlu0 %379
    %v382 = vadd.f32 %v370, %v380
    %v383 = vmul.f32 %v368, %v353
    %v384 = vmul.f32 %v375, %v122
    %386 = vrot.lane.b32.xlu0 %v384, 32
    %v387 = vpop.permute.xlu0 %386
    %v389 = vadd.f32 %v383, %v387
    %391 = vrot.lane.b32.xlu0 %v370, 32
    %v392 = vpop.permute.xlu0 %391
    %v394 = vadd.f32 %v124, %v392
    %s395 = sadd.s32 %s125, 1
    %s396 = scalar_lea.vmem [#allocation8], 1
    %v397 = vld [vmem:[%s396] sm:$0x1]
    %v398 = vpack.c.bf16 %v235, %v235
    %400 = vrot.lane.b32.xlu0 %v398, 64
    %v401 = vpop.permute.xlu0 %400
    %v404 = vsel %vm131, %v397, %v401
    %v405 = vsel %vm165, %v404, 0
    %407 = vmatprep.subr.bf16.mxu0 0
    %408 = vmatpush1.bf16.msra.mxu0 %v157
    %409 = vmatprep.subr.bf16.mxu0 0
    %410 = vmatpush1.bf16.msra.mxu0 %v158
    %411 = vmatprep.subr.bf16.mxu0 0
    %412 = vmatpush1.bf16.msra.mxu0 %v159
    %413 = vmatprep.subr.bf16.mxu0 0
    %414 = vmatpush1.bf16.msra.mxu0 %v160
    %415 = vmatprep.subr.bf16.mxu0 0
    %416 = vmatpush1.bf16.msra.mxu0 0
    %417 = vmatprep.subr.bf16.mxu0 0
    %418 = vmatpush1.bf16.msra.mxu0 0
    %419 = vmatprep.subr.bf16.mxu0 0
    %420 = vmatpush1.bf16.msra.mxu0 0
    %421 = vmatprep.subr.bf16.mxu0 0
    %422 = vmatpush1.bf16.msra.mxu0 0
    %423 = vmatprep.subr.bf16.mxu0 0
    %424 = vmatpush1.bf16.msra.mxu0 0
    %425 = vmatprep.subr.bf16.mxu0 0
    %426 = vmatpush1.bf16.msra.mxu0 0
    %427 = vmatprep.subr.bf16.mxu0 0
    %428 = vmatpush1.bf16.msra.mxu0 0
    %429 = vmatprep.subr.bf16.mxu0 0
    %430 = vmatpush1.bf16.msra.mxu0 0
    %431 = vmatprep.subr.bf16.mxu0 0
    %432 = vmatpush1.bf16.msra.mxu0 0
    %433 = vmatprep.subr.bf16.mxu0 0
    %434 = vmatpush1.bf16.msra.mxu0 0
    %435 = vmatprep.subr.bf16.mxu0 0
    %436 = vmatpush1.bf16.msra.mxu0 0
    %437 = vmatprep.subr.bf16.mxu0 0
    %438 = vmatpush1.bf16.msra.mxu0 0
    %439 = vmatprep.mubr.bf16.mxu0 0
    %440 = vmatmul.mubr.bf16.gmra.mrb[0].mxu0 %v405
    %v441 = vpop.f32.mrb[0].mxu0
    %v442 = vadd.f32 %v139, %v441
    %v443 = vpop.f32.mrb[0].mxu0
    %v444 = vpop.f32.mrb[0].mxu0
    %v445 = vpop.f32.mrb[0].mxu0
    %446 = vdwg.mxu0
    %v447 = vxor.u32 %v442, 2147483648
    %v448 = vmul.f32 %v447, 1.442695
    %v449 = vpow.pop %v448
    %v450 = vadd.f32 %v449, 1.0
    %v451 = vrcp.pop %v450
    %v452 = vmul.f32 1.0, %v451
    %v453 = vtanh.pop %v442
    %v454 = vmul.f32 %v452, %v229
    %456 = vrot.lane.b32.xlu0 %v453, 64
    %v457 = vpop.permute.xlu0 %456
    %v459 = vmul.f32 %v452, %v457
    %461 = vrot.lane.b32.xlu0 %v459, 32
    %v462 = vpop.permute.xlu0 %461
    %v464 = vadd.f32 %v454, %v462
    %v465 = vtanh.pop %v464
    %467 = vrot.lane.b32.xlu0 %v465, 64
    %v468 = vpop.permute.xlu0 %467
    %v470 = vmul.f32 %v452, %v468
    %v471 = vstv %s395
    %vm472 = vcmp.gt.s32.totalorder %v100, %v471
    %v473 = vsel %vm472, 1, 0
    %v474 = vcvt.s32.f32 %v473
    %476 = vset.pattern.permute.xlu0 0
    %477 = vperm.xlu0 %476, %v474
    %v478 = vpop.permute.xlu0 %477
    %v480 = vmul.f32 %v478, %v470
    %482 = vrot.lane.b32.xlu0 %v480, 32
    %v483 = vpop.permute.xlu0 %482
    %v485 = vadd.f32 %v250, %v483
    %s486 = scalar_lea.vmem [#allocation11], 6
    %v487 = vld [vmem:[%s486] sm:$0x1]
    %v488 = vpack.c.bf16 %v382, %v382
    %490 = vrot.lane.b32.xlu0 %v488, 64
    %v491 = vpop.permute.xlu0 %490
    %v494 = vsel %vm131, %v487, %v491
    %v495 = vsel %vm165, %v494, 0
    %497 = vmatprep.subr.bf16.mxu0 0
    %498 = vmatpush1.bf16.msra.mxu0 %v282
    %499 = vmatprep.subr.bf16.mxu0 0
    %500 = vmatpush1.bf16.msra.mxu0 %v283
    %501 = vmatprep.subr.bf16.mxu0 0
    %502 = vmatpush1.bf16.msra.mxu0 %v284
    %503 = vmatprep.subr.bf16.mxu0 0
    %504 = vmatpush1.bf16.msra.mxu0 %v285
    %505 = vmatprep.subr.bf16.mxu0 0
    %506 = vmatpush1.bf16.msra.mxu0 0
    %507 = vmatprep.subr.bf16.mxu0 0
    %508 = vmatpush1.bf16.msra.mxu0 0
    %509 = vmatprep.subr.bf16.mxu0 0
    %510 = vmatpush1.bf16.msra.mxu0 0
    %511 = vmatprep.subr.bf16.mxu0 0
    %512 = vmatpush1.bf16.msra.mxu0 0
    %513 = vmatprep.subr.bf16.mxu0 0
    %514 = vmatpush1.bf16.msra.mxu0 0
    %515 = vmatprep.subr.bf16.mxu0 0
    %516 = vmatpush1.bf16.msra.mxu0 0
    %517 = vmatprep.subr.bf16.mxu0 0
    %518 = vmatpush1.bf16.msra.mxu0 0
    %519 = vmatprep.subr.bf16.mxu0 0
    %520 = vmatpush1.bf16.msra.mxu0 0
    %521 = vmatprep.subr.bf16.mxu0 0
    %522 = vmatpush1.bf16.msra.mxu0 0
    %523 = vmatprep.subr.bf16.mxu0 0
    %524 = vmatpush1.bf16.msra.mxu0 0
    %525 = vmatprep.subr.bf16.mxu0 0
    %526 = vmatpush1.bf16.msra.mxu0 0
    %527 = vmatprep.subr.bf16.mxu0 0
    %528 = vmatpush1.bf16.msra.mxu0 0
    %529 = vmatprep.mubr.bf16.mxu0 0
    %530 = vmatmul.mubr.bf16.gmra.mrb[0].mxu0 %v495
    %v531 = vpop.f32.mrb[0].mxu0
    %v532 = vadd.f32 %v264, %v531
    %v533 = vpop.f32.mrb[0].mxu0
    %v534 = vpop.f32.mrb[0].mxu0
    %v535 = vpop.f32.mrb[0].mxu0
    %536 = vdwg.mxu0
    %v537 = vxor.u32 %v532, 2147483648
    %v538 = vmul.f32 %v537, 1.442695
    %v539 = vpow.pop %v538
    %v540 = vadd.f32 %v539, 1.0
    %v541 = vrcp.pop %v540
    %v542 = vmul.f32 1.0, %v541
    %v543 = vtanh.pop %v532
    %v544 = vmul.f32 %v542, %v389
    %546 = vrot.lane.b32.xlu0 %v543, 64
    %v547 = vpop.permute.xlu0 %546
    %v549 = vmul.f32 %v542, %v547
    %551 = vrot.lane.b32.xlu0 %v549, 32
    %v552 = vpop.permute.xlu0 %551
    %v554 = vadd.f32 %v544, %v552
    %v555 = vtanh.pop %v554
    %557 = vrot.lane.b32.xlu0 %v555, 64
    %v558 = vpop.permute.xlu0 %557
    %v560 = vmul.f32 %v542, %v558
    %s561 = ssub.s32 6, %s125
    %v562 = vstv %s561
    %vm563 = vcmp.gt.s32.totalorder %v100, %v562
    %v564 = vsel %vm563, 1, 0
    %v565 = vcvt.s32.f32 %v564
    %567 = vset.pattern.permute.xlu0 0
    %568 = vperm.xlu0 %567, %v565
    %v569 = vpop.permute.xlu0 %568
    %v571 = vmul.f32 %v569, %v560
    %v572 = vsub.f32 1.0, %v565
    %574 = vset.pattern.permute.xlu0 0
    %575 = vperm.xlu0 %574, %v572
    %v576 = vpop.permute.xlu0 %575
    %v578 = vmul.f32 %v576, %v382
    %v579 = vadd.f32 %v571, %v578
    %v580 = vmul.f32 %v569, %v554
    %v581 = vmul.f32 %v576, %v389
    %v582 = vadd.f32 %v580, %v581
    %584 = vrot.lane.b32.xlu0 %v571, 32
    %v585 = vpop.permute.xlu0 %584
    %v587 = vadd.f32 %v394, %v585
    %s588 = sadd.s32 %s125, 2
    %s589 = scalar_lea.vmem [#allocation8], 2
    %v590 = vld [vmem:[%s589] sm:$0x1]
    %v591 = vpack.c.bf16 %v470, %v470
    %593 = vrot.lane.b32.xlu0 %v591, 64
    %v594 = vpop.permute.xlu0 %593
    %v597 = vsel %vm131, %v590, %v594
    %v598 = vsel %vm165, %v597, 0
    %600 = vmatprep.subr.bf16.mxu0 0
    %601 = vmatpush1.bf16.msra.mxu0 %v157
    %602 = vmatprep.subr.bf16.mxu0 0
    %603 = vmatpush1.bf16.msra.mxu0 %v158
    %604 = vmatprep.subr.bf16.mxu0 0
    %605 = vmatpush1.bf16.msra.mxu0 %v159
    %606 = vmatprep.subr.bf16.mxu0 0
    %607 = vmatpush1.bf16.msra.mxu0 %v160
    %608 = vmatprep.subr.bf16.mxu0 0
    %609 = vmatpush1.bf16.msra.mxu0 0
    %610 = vmatprep.subr.bf16.mxu0 0
    %611 = vmatpush1.bf16.msra.mxu0 0
    %612 = vmatprep.subr.bf16.mxu0 0
    %613 = vmatpush1.bf16.msra.mxu0 0
    %614 = vmatprep.subr.bf16.mxu0 0
    %615 = vmatpush1.bf16.msra.mxu0 0
    %616 = vmatprep.subr.bf16.mxu0 0
    %617 = vmatpush1.bf16.msra.mxu0 0
    %618 = vmatprep.subr.bf16.mxu0 0
    %619 = vmatpush1.bf16.msra.mxu0 0
    %620 = vmatprep.subr.bf16.mxu0 0
    %621 = vmatpush1.bf16.msra.mxu0 0
    %622 = vmatprep.subr.bf16.mxu0 0
    %623 = vmatpush1.bf16.msra.mxu0 0
    %624 = vmatprep.subr.bf16.mxu0 0
    %625 = vmatpush1.bf16.msra.mxu0 0
    %626 = vmatprep.subr.bf16.mxu0 0
    %627 = vmatpush1.bf16.msra.mxu0 0
    %628 = vmatprep.subr.bf16.mxu0 0
    %629 = vmatpush1.bf16.msra.mxu0 0
    %630 = vmatprep.subr.bf16.mxu0 0
    %631 = vmatpush1.bf16.msra.mxu0 0
    %632 = vmatprep.mubr.bf16.mxu0 0
    %633 = vmatmul.mubr.bf16.gmra.mrb[0].mxu0 %v598
    %v634 = vpop.f32.mrb[0].mxu0
    %v635 = vadd.f32 %v139, %v634
    %v636 = vpop.f32.mrb[0].mxu0
    %v637 = vpop.f32.mrb[0].mxu0
    %v638 = vpop.f32.mrb[0].mxu0
    %639 = vdwg.mxu0
    %v640 = vxor.u32 %v635, 2147483648
    %v641 = vmul.f32 %v640, 1.442695
    %v642 = vpow.pop %v641
    %v643 = vadd.f32 %v642, 1.0
    %v644 = vrcp.pop %v643
    %v645 = vmul.f32 1.0, %v644
    %v646 = vtanh.pop %v635
    %v647 = vmul.f32 %v645, %v464
    %649 = vrot.lane.b32.xlu0 %v646, 64
    %v650 = vpop.permute.xlu0 %649
    %v652 = vmul.f32 %v645, %v650
    %654 = vrot.lane.b32.xlu0 %v652, 32
    %v655 = vpop.permute.xlu0 %654
    %v657 = vadd.f32 %v647, %v655
    %v658 = vtanh.pop %v657
    %660 = vrot.lane.b32.xlu0 %v658, 64
    %v661 = vpop.permute.xlu0 %660
    %v663 = vmul.f32 %v645, %v661
    %v664 = vstv %s588
    %vm665 = vcmp.gt.s32.totalorder %v100, %v664
    %v666 = vsel %vm665, 1, 0
    %v667 = vcvt.s32.f32 %v666
    %669 = vset.pattern.permute.xlu0 0
    %670 = vperm.xlu0 %669, %v667
    %v671 = vpop.permute.xlu0 %670
    %v673 = vmul.f32 %v671, %v663
    %675 = vrot.lane.b32.xlu0 %v673, 32
    %v676 = vpop.permute.xlu0 %675
    %v678 = vadd.f32 %v485, %v676
    %s679 = scalar_lea.vmem [#allocation11], 5
    %v680 = vld [vmem:[%s679] sm:$0x1]
    %v681 = vpack.c.bf16 %v579, %v579
    %683 = vrot.lane.b32.xlu0 %v681, 64
    %v684 = vpop.permute.xlu0 %683
    %v687 = vsel %vm131, %v680, %v684
    %v688 = vsel %vm165, %v687, 0
    %690 = vmatprep.subr.bf16.mxu0 0
    %691 = vmatpush1.bf16.msra.mxu0 %v282
    %692 = vmatprep.subr.bf16.mxu0 0
    %693 = vmatpush1.bf16.msra.mxu0 %v283
    %694 = vmatprep.subr.bf16.mxu0 0
    %695 = vmatpush1.bf16.msra.mxu0 %v284
    %696 = vmatprep.subr.bf16.mxu0 0
    %697 = vmatpush1.bf16.msra.mxu0 %v285
    %698 = vmatprep.subr.bf16.mxu0 0
    %699 = vmatpush1.bf16.msra.mxu0 0
    %700 = vmatprep.subr.bf16.mxu0 0
    %701 = vmatpush1.bf16.msra.mxu0 0
    %702 = vmatprep.subr.bf16.mxu0 0
    %703 = vmatpush1.bf16.msra.mxu0 0
    %704 = vmatprep.subr.bf16.mxu0 0
    %705 = vmatpush1.bf16.msra.mxu0 0
    %706 = vmatprep.subr.bf16.mxu0 0
    %707 = vmatpush1.bf16.msra.mxu0 0
    %708 = vmatprep.subr.bf16.mxu0 0
    %709 = vmatpush1.bf16.msra.mxu0 0
    %710 = vmatprep.subr.bf16.mxu0 0
    %711 = vmatpush1.bf16.msra.mxu0 0
    %712 = vmatprep.subr.bf16.mxu0 0
    %713 = vmatpush1.bf16.msra.mxu0 0
    %714 = vmatprep.subr.bf16.mxu0 0
    %715 = vmatpush1.bf16.msra.mxu0 0
    %716 = vmatprep.subr.bf16.mxu0 0
    %717 = vmatpush1.bf16.msra.mxu0 0
    %718 = vmatprep.subr.bf16.mxu0 0
    %719 = vmatpush1.bf16.msra.mxu0 0
    %720 = vmatprep.subr.bf16.mxu0 0
    %721 = vmatpush1.bf16.msra.mxu0 0
    %722 = vmatprep.mubr.bf16.mxu0 0
    %723 = vmatmul.mubr.bf16.gmra.mrb[0].mxu0 %v688
    %v724 = vpop.f32.mrb[0].mxu0
    %v725 = vadd.f32 %v264, %v724
    %v726 = vpop.f32.mrb[0].mxu0
    %v727 = vpop.f32.mrb[0].mxu0
    %v728 = vpop.f32.mrb[0].mxu0
    %729 = vdwg.mxu0
    %v730 = vxor.u32 %v725, 2147483648
    %v731 = vmul.f32 %v730, 1.442695
    %v732 = vpow.pop %v731
    %v733 = vadd.f32 %v732, 1.0
    %v734 = vrcp.pop %v733
    %v735 = vmul.f32 1.0, %v734
    %v736 = vtanh.pop %v725
    %v737 = vmul.f32 %v735, %v582
    %739 = vrot.lane.b32.xlu0 %v736, 64
    %v740 = vpop.permute.xlu0 %739
    %v742 = vmul.f32 %v735, %v740
    %744 = vrot.lane.b32.xlu0 %v742, 32
    %v745 = vpop.permute.xlu0 %744
    %v747 = vadd.f32 %v737, %v745
    %v748 = vtanh.pop %v747
    %750 = vrot.lane.b32.xlu0 %v748, 64
    %v751 = vpop.permute.xlu0 %750
    %v753 = vmul.f32 %v735, %v751
    %s754 = ssub.s32 5, %s125
    %v755 = vstv %s754
    %vm756 = vcmp.gt.s32.totalorder %v100, %v755
    %v757 = vsel %vm756, 1, 0
    %v758 = vcvt.s32.f32 %v757
    %760 = vset.pattern.permute.xlu0 0
    %761 = vperm.xlu0 %760, %v758
    %v762 = vpop.permute.xlu0 %761
    %v764 = vmul.f32 %v762, %v753
    %v765 = vsub.f32 1.0, %v758
    %767 = vset.pattern.permute.xlu0 0
    %768 = vperm.xlu0 %767, %v765
    %v769 = vpop.permute.xlu0 %768
    %v771 = vmul.f32 %v769, %v579
    %v772 = vadd.f32 %v764, %v771
    %v773 = vmul.f32 %v762, %v747
    %v774 = vmul.f32 %v769, %v582
    %v775 = vadd.f32 %v773, %v774
    %777 = vrot.lane.b32.xlu0 %v764, 32
    %v778 = vpop.permute.xlu0 %777
    %v780 = vadd.f32 %v587, %v778
    %s781 = sadd.s32 %s125, 3
    %s782 = scalar_lea.vmem [#allocation8], 3
    %v783 = vld [vmem:[%s782] sm:$0x1]
    %v784 = vpack.c.bf16 %v663, %v663
    %786 = vrot.lane.b32.xlu0 %v784, 64
    %v787 = vpop.permute.xlu0 %786
    %v790 = vsel %vm131, %v783, %v787
    %v791 = vsel %vm165, %v790, 0
    %793 = vmatprep.subr.bf16.mxu0 0
    %794 = vmatpush1.bf16.msra.mxu0 %v157
    %795 = vmatprep.subr.bf16.mxu0 0
    %796 = vmatpush1.bf16.msra.mxu0 %v158
    %797 = vmatprep.subr.bf16.mxu0 0
    %798 = vmatpush1.bf16.msra.mxu0 %v159
    %799 = vmatprep.subr.bf16.mxu0 0
    %800 = vmatpush1.bf16.msra.mxu0 %v160
    %801 = vmatprep.subr.bf16.mxu0 0
    %802 = vmatpush1.bf16.msra.mxu0 0
    %803 = vmatprep.subr.bf16.mxu0 0
    %804 = vmatpush1.bf16.msra.mxu0 0
    %805 = vmatprep.subr.bf16.mxu0 0
    %806 = vmatpush1.bf16.msra.mxu0 0
    %807 = vmatprep.subr.bf16.mxu0 0
    %808 = vmatpush1.bf16.msra.mxu0 0
    %809 = vmatprep.subr.bf16.mxu0 0
    %810 = vmatpush1.bf16.msra.mxu0 0
    %811 = vmatprep.subr.bf16.mxu0 0
    %812 = vmatpush1.bf16.msra.mxu0 0
    %813 = vmatprep.subr.bf16.mxu0 0
    %814 = vmatpush1.bf16.msra.mxu0 0
    %815 = vmatprep.subr.bf16.mxu0 0
    %816 = vmatpush1.bf16.msra.mxu0 0
    %817 = vmatprep.subr.bf16.mxu0 0
    %818 = vmatpush1.bf16.msra.mxu0 0
    %819 = vmatprep.subr.bf16.mxu0 0
    %820 = vmatpush1.bf16.msra.mxu0 0
    %821 = vmatprep.subr.bf16.mxu0 0
    %822 = vmatpush1.bf16.msra.mxu0 0
    %823 = vmatprep.subr.bf16.mxu0 0
    %824 = vmatpush1.bf16.msra.mxu0 0
    %825 = vmatprep.mubr.bf16.mxu0 0
    %826 = vmatmul.mubr.bf16.gmra.mrb[0].mxu0 %v791
    %v827 = vpop.f32.mrb[0].mxu0
    %v828 = vadd.f32 %v139, %v827
    %v829 = vpop.f32.mrb[0].mxu0
    %v830 = vpop.f32.mrb[0].mxu0
    %v831 = vpop.f32.mrb[0].mxu0
    %832 = vdwg.mxu0
    %v833 = vxor.u32 %v828, 2147483648
    %v834 = vmul.f32 %v833, 1.442695
    %v835 = vpow.pop %v834
    %v836 = vadd.f32 %v835, 1.0
    %v837 = vrcp.pop %v836
    %v838 = vmul.f32 1.0, %v837
    %v839 = vtanh.pop %v828
    %v840 = vmul.f32 %v838, %v657
    %842 = vrot.lane.b32.xlu0 %v839, 64
    %v843 = vpop.permute.xlu0 %842
    %v845 = vmul.f32 %v838, %v843
    %847 = vrot.lane.b32.xlu0 %v845, 32
    %v848 = vpop.permute.xlu0 %847
    %v850 = vadd.f32 %v840, %v848
    %v851 = vtanh.pop %v850
    %853 = vrot.lane.b32.xlu0 %v851, 64
    %v854 = vpop.permute.xlu0 %853
    %v856 = vmul.f32 %v838, %v854
    %v857 = vstv %s781
    %vm858 = vcmp.gt.s32.totalorder %v100, %v857
    %v859 = vsel %vm858, 1, 0
    %v860 = vcvt.s32.f32 %v859
    %862 = vset.pattern.permute.xlu0 0
    %863 = vperm.xlu0 %862, %v860
    %v864 = vpop.permute.xlu0 %863
    %v866 = vmul.f32 %v864, %v856
    %868 = vrot.lane.b32.xlu0 %v866, 32
    %v869 = vpop.permute.xlu0 %868
    %v871 = vadd.f32 %v678, %v869
    %s872 = scalar_lea.vmem [#allocation11], 4
    %v873 = vld [vmem:[%s872] sm:$0x1]
    %v874 = vpack.c.bf16 %v772, %v772
    %876 = vrot.lane.b32.xlu0 %v874, 64
    %v877 = vpop.permute.xlu0 %876
    %v880 = vsel %vm131, %v873, %v877
    %v881 = vsel %vm165, %v880, 0
    %883 = vmatprep.subr.bf16.mxu0 0
    %884 = vmatpush1.bf16.msra.mxu0 %v282
    %885 = vmatprep.subr.bf16.mxu0 0
    %886 = vmatpush1.bf16.msra.mxu0 %v283
    %887 = vmatprep.subr.bf16.mxu0 0
    %888 = vmatpush1.bf16.msra.mxu0 %v284
    %889 = vmatprep.subr.bf16.mxu0 0
    %890 = vmatpush1.bf16.msra.mxu0 %v285
    %891 = vmatprep.subr.bf16.mxu0 0
    %892 = vmatpush1.bf16.msra.mxu0 0
    %893 = vmatprep.subr.bf16.mxu0 0
    %894 = vmatpush1.bf16.msra.mxu0 0
    %895 = vmatprep.subr.bf16.mxu0 0
    %896 = vmatpush1.bf16.msra.mxu0 0
    %897 = vmatprep.subr.bf16.mxu0 0
    %898 = vmatpush1.bf16.msra.mxu0 0
    %899 = vmatprep.subr.bf16.mxu0 0
    %900 = vmatpush1.bf16.msra.mxu0 0
    %901 = vmatprep.subr.bf16.mxu0 0
    %902 = vmatpush1.bf16.msra.mxu0 0
    %903 = vmatprep.subr.bf16.mxu0 0
    %904 = vmatpush1.bf16.msra.mxu0 0
    %905 = vmatprep.subr.bf16.mxu0 0
    %906 = vmatpush1.bf16.msra.mxu0 0
    %907 = vmatprep.subr.bf16.mxu0 0
    %908 = vmatpush1.bf16.msra.mxu0 0
    %909 = vmatprep.subr.bf16.mxu0 0
    %910 = vmatpush1.bf16.msra.mxu0 0
    %911 = vmatprep.subr.bf16.mxu0 0
    %912 = vmatpush1.bf16.msra.mxu0 0
    %913 = vmatprep.subr.bf16.mxu0 0
    %914 = vmatpush1.bf16.msra.mxu0 0
    %915 = vmatprep.mubr.bf16.mxu0 0
    %916 = vmatmul.mubr.bf16.gmra.mrb[0].mxu0 %v881
    %v917 = vpop.f32.mrb[0].mxu0
    %v918 = vadd.f32 %v264, %v917
    %v919 = vpop.f32.mrb[0].mxu0
    %v920 = vpop.f32.mrb[0].mxu0
    %v921 = vpop.f32.mrb[0].mxu0
    %922 = vdwg.mxu0
    %v923 = vxor.u32 %v918, 2147483648
    %v924 = vmul.f32 %v923, 1.442695
    %v925 = vpow.pop %v924
    %v926 = vadd.f32 %v925, 1.0
    %v927 = vrcp.pop %v926
    %v928 = vmul.f32 1.0, %v927
    %v929 = vtanh.pop %v918
    %v930 = vmul.f32 %v928, %v775
    %932 = vrot.lane.b32.xlu0 %v929, 64
    %v933 = vpop.permute.xlu0 %932
    %v935 = vmul.f32 %v928, %v933
    %937 = vrot.lane.b32.xlu0 %v935, 32
    %v938 = vpop.permute.xlu0 %937
    %v940 = vadd.f32 %v930, %v938
    %v941 = vtanh.pop %v940
    %943 = vrot.lane.b32.xlu0 %v941, 64
    %v944 = vpop.permute.xlu0 %943
    %v946 = vmul.f32 %v928, %v944
    %s947 = ssub.s32 4, %s125
    %v948 = vstv %s947
    %vm949 = vcmp.gt.s32.totalorder %v100, %v948
    %v950 = vsel %vm949, 1, 0
    %v951 = vcvt.s32.f32 %v950
    %953 = vset.pattern.permute.xlu0 0
    %954 = vperm.xlu0 %953, %v951
    %v955 = vpop.permute.xlu0 %954
    %v957 = vmul.f32 %v955, %v946
    %v958 = vsub.f32 1.0, %v951
    %960 = vset.pattern.permute.xlu0 0
    %961 = vperm.xlu0 %960, %v958
    %v962 = vpop.permute.xlu0 %961
    %v964 = vmul.f32 %v962, %v772
    %v965 = vadd.f32 %v957, %v964
    %v966 = vmul.f32 %v955, %v940
    %v967 = vmul.f32 %v962, %v775
    %v968 = vadd.f32 %v966, %v967
    %970 = vrot.lane.b32.xlu0 %v957, 32
    %v971 = vpop.permute.xlu0 %970
    %v973 = vadd.f32 %v780, %v971
    %s974 = sadd.s32 %s125, 4
    %s975 = scalar_lea.vmem [#allocation8], 4
    %v976 = vld [vmem:[%s975] sm:$0x1]
    %v977 = vpack.c.bf16 %v856, %v856
    %979 = vrot.lane.b32.xlu0 %v977, 64
    %v980 = vpop.permute.xlu0 %979
    %v983 = vsel %vm131, %v976, %v980
    %v984 = vsel %vm165, %v983, 0
    %986 = vmatprep.subr.bf16.mxu0 0
    %987 = vmatpush1.bf16.msra.mxu0 %v157
    %988 = vmatprep.subr.bf16.mxu0 0
    %989 = vmatpush1.bf16.msra.mxu0 %v158
    %990 = vmatprep.subr.bf16.mxu0 0
    %991 = vmatpush1.bf16.msra.mxu0 %v159
    %992 = vmatprep.subr.bf16.mxu0 0
    %993 = vmatpush1.bf16.msra.mxu0 %v160
    %994 = vmatprep.subr.bf16.mxu0 0
    %995 = vmatpush1.bf16.msra.mxu0 0
    %996 = vmatprep.subr.bf16.mxu0 0
    %997 = vmatpush1.bf16.msra.mxu0 0
    %998 = vmatprep.subr.bf16.mxu0 0
    %999 = vmatpush1.bf16.msra.mxu0 0
    %1000 = vmatprep.subr.bf16.mxu0 0
    %1001 = vmatpush1.bf16.msra.mxu0 0
    %1002 = vmatprep.subr.bf16.mxu0 0
    %1003 = vmatpush1.bf16.msra.mxu0 0
    %1004 = vmatprep.subr.bf16.mxu0 0
    %1005 = vmatpush1.bf16.msra.mxu0 0
    %1006 = vmatprep.subr.bf16.mxu0 0
    %1007 = vmatpush1.bf16.msra.mxu0 0
    %1008 = vmatprep.subr.bf16.mxu0 0
    %1009 = vmatpush1.bf16.msra.mxu0 0
    %1010 = vmatprep.subr.bf16.mxu0 0
    %1011 = vmatpush1.bf16.msra.mxu0 0
    %1012 = vmatprep.subr.bf16.mxu0 0
    %1013 = vmatpush1.bf16.msra.mxu0 0
    %1014 = vmatprep.subr.bf16.mxu0 0
    %1015 = vmatpush1.bf16.msra.mxu0 0
    %1016 = vmatprep.subr.bf16.mxu0 0
    %1017 = vmatpush1.bf16.msra.mxu0 0
    %1018 = vmatprep.mubr.bf16.mxu0 0
    %1019 = vmatmul.mubr.bf16.gmra.mrb[0].mxu0 %v984
    %v1020 = vpop.f32.mrb[0].mxu0
    %v1021 = vadd.f32 %v139, %v1020
    %v1022 = vpop.f32.mrb[0].mxu0
    %v1023 = vpop.f32.mrb[0].mxu0
    %v1024 = vpop.f32.mrb[0].mxu0
    %1025 = vdwg.mxu0
    %v1026 = vxor.u32 %v1021, 2147483648
    %v1027 = vmul.f32 %v1026, 1.442695
    %v1028 = vpow.pop %v1027
    %v1029 = vadd.f32 %v1028, 1.0
    %v1030 = vrcp.pop %v1029
    %v1031 = vmul.f32 1.0, %v1030
    %v1032 = vtanh.pop %v1021
    %v1033 = vmul.f32 %v1031, %v850
    %1035 = vrot.lane.b32.xlu0 %v1032, 64
    %v1036 = vpop.permute.xlu0 %1035
    %v1038 = vmul.f32 %v1031, %v1036
    %1040 = vrot.lane.b32.xlu0 %v1038, 32
    %v1041 = vpop.permute.xlu0 %1040
    %v1043 = vadd.f32 %v1033, %v1041
    %v1044 = vtanh.pop %v1043
    %1046 = vrot.lane.b32.xlu0 %v1044, 64
    %v1047 = vpop.permute.xlu0 %1046
    %v1049 = vmul.f32 %v1031, %v1047
    %v1050 = vstv %s974
    %vm1051 = vcmp.gt.s32.totalorder %v100, %v1050
    %v1052 = vsel %vm1051, 1, 0
    %v1053 = vcvt.s32.f32 %v1052
    %1055 = vset.pattern.permute.xlu0 0
    %1056 = vperm.xlu0 %1055, %v1053
    %v1057 = vpop.permute.xlu0 %1056
    %v1059 = vmul.f32 %v1057, %v1049
    %1061 = vrot.lane.b32.xlu0 %v1059, 32
    %v1062 = vpop.permute.xlu0 %1061
    %v1064 = vadd.f32 %v871, %v1062
    %s1065 = scalar_lea.vmem [#allocation11], 3
    %v1066 = vld [vmem:[%s1065] sm:$0x1]
    %v1067 = vpack.c.bf16 %v965, %v965
    %1069 = vrot.lane.b32.xlu0 %v1067, 64
    %v1070 = vpop.permute.xlu0 %1069
    %v1073 = vsel %vm131, %v1066, %v1070
    %v1074 = vsel %vm165, %v1073, 0
    %1076 = vmatprep.subr.bf16.mxu0 0
    %1077 = vmatpush1.bf16.msra.mxu0 %v282
    %1078 = vmatprep.subr.bf16.mxu0 0
    %1079 = vmatpush1.bf16.msra.mxu0 %v283
    %1080 = vmatprep.subr.bf16.mxu0 0
    %1081 = vmatpush1.bf16.msra.mxu0 %v284
    %1082 = vmatprep.subr.bf16.mxu0 0
    %1083 = vmatpush1.bf16.msra.mxu0 %v285
    %1084 = vmatprep.subr.bf16.mxu0 0
    %1085 = vmatpush1.bf16.msra.mxu0 0
    %1086 = vmatprep.subr.bf16.mxu0 0
    %1087 = vmatpush1.bf16.msra.mxu0 0
    %1088 = vmatprep.subr.bf16.mxu0 0
    %1089 = vmatpush1.bf16.msra.mxu0 0
    %1090 = vmatprep.subr.bf16.mxu0 0
    %1091 = vmatpush1.bf16.msra.mxu0 0
    %1092 = vmatprep.subr.bf16.mxu0 0
    %1093 = vmatpush1.bf16.msra.mxu0 0
    %1094 = vmatprep.subr.bf16.mxu0 0
    %1095 = vmatpush1.bf16.msra.mxu0 0
    %1096 = vmatprep.subr.bf16.mxu0 0
    %1097 = vmatpush1.bf16.msra.mxu0 0
    %1098 = vmatprep.subr.bf16.mxu0 0
    %1099 = vmatpush1.bf16.msra.mxu0 0
    %1100 = vmatprep.subr.bf16.mxu0 0
    %1101 = vmatpush1.bf16.msra.mxu0 0
    %1102 = vmatprep.subr.bf16.mxu0 0
    %1103 = vmatpush1.bf16.msra.mxu0 0
    %1104 = vmatprep.subr.bf16.mxu0 0
    %1105 = vmatpush1.bf16.msra.mxu0 0
    %1106 = vmatprep.subr.bf16.mxu0 0
    %1107 = vmatpush1.bf16.msra.mxu0 0
    %1108 = vmatprep.mubr.bf16.mxu0 0
    %1109 = vmatmul.mubr.bf16.gmra.mrb[0].mxu0 %v1074
    %v1110 = vpop.f32.mrb[0].mxu0
    %v1111 = vadd.f32 %v264, %v1110
    %v1112 = vpop.f32.mrb[0].mxu0
    %v1113 = vpop.f32.mrb[0].mxu0
    %v1114 = vpop.f32.mrb[0].mxu0
    %1115 = vdwg.mxu0
    %v1116 = vxor.u32 %v1111, 2147483648
    %v1117 = vmul.f32 %v1116, 1.442695
    %v1118 = vpow.pop %v1117
    %v1119 = vadd.f32 %v1118, 1.0
    %v1120 = vrcp.pop %v1119
    %v1121 = vmul.f32 1.0, %v1120
    %v1122 = vtanh.pop %v1111
    %v1123 = vmul.f32 %v1121, %v968
    %1125 = vrot.lane.b32.xlu0 %v1122, 64
    %v1126 = vpop.permute.xlu0 %1125
    %v1128 = vmul.f32 %v1121, %v1126
    %1130 = vrot.lane.b32.xlu0 %v1128, 32
    %v1131 = vpop.permute.xlu0 %1130
    %v1133 = vadd.f32 %v1123, %v1131
    %v1134 = vtanh.pop %v1133
    %1136 = vrot.lane.b32.xlu0 %v1134, 64
    %v1137 = vpop.permute.xlu0 %1136
    %v1139 = vmul.f32 %v1121, %v1137
    %s1140 = ssub.s32 3, %s125
    %v1141 = vstv %s1140
    %vm1142 = vcmp.gt.s32.totalorder %v100, %v1141
    %v1143 = vsel %vm1142, 1, 0
    %v1144 = vcvt.s32.f32 %v1143
    %1146 = vset.pattern.permute.xlu0 0
    %1147 = vperm.xlu0 %1146, %v1144
    %v1148 = vpop.permute.xlu0 %1147
    %v1150 = vmul.f32 %v1148, %v1139
    %v1151 = vsub.f32 1.0, %v1144
    %1153 = vset.pattern.permute.xlu0 0
    %1154 = vperm.xlu0 %1153, %v1151
    %v1155 = vpop.permute.xlu0 %1154
    %v1157 = vmul.f32 %v1155, %v965
    %v1158 = vadd.f32 %v1150, %v1157
    %v1159 = vmul.f32 %v1148, %v1133
    %v1160 = vmul.f32 %v1155, %v968
    %v1161 = vadd.f32 %v1159, %v1160
    %1163 = vrot.lane.b32.xlu0 %v1150, 32
    %v1164 = vpop.permute.xlu0 %1163
    %v1166 = vadd.f32 %v973, %v1164
    %s1167 = sadd.s32 %s125, 5
    %s1168 = scalar_lea.vmem [#allocation8], 5
    %v1169 = vld [vmem:[%s1168] sm:$0x1]
    %v1170 = vpack.c.bf16 %v1049, %v1049
    %1172 = vrot.lane.b32.xlu0 %v1170, 64
    %v1173 = vpop.permute.xlu0 %1172
    %v1176 = vsel %vm131, %v1169, %v1173
    %v1177 = vsel %vm165, %v1176, 0
    %1179 = vmatprep.subr.bf16.mxu0 0
    %1180 = vmatpush1.bf16.msra.mxu0 %v157
    %1181 = vmatprep.subr.bf16.mxu0 0
    %1182 = vmatpush1.bf16.msra.mxu0 %v158
    %1183 = vmatprep.subr.bf16.mxu0 0
    %1184 = vmatpush1.bf16.msra.mxu0 %v159
    %1185 = vmatprep.subr.bf16.mxu0 0
    %1186 = vmatpush1.bf16.msra.mxu0 %v160
    %1187 = vmatprep.subr.bf16.mxu0 0
    %1188 = vmatpush1.bf16.msra.mxu0 0
    %1189 = vmatprep.subr.bf16.mxu0 0
    %1190 = vmatpush1.bf16.msra.mxu0 0
    %1191 = vmatprep.subr.bf16.mxu0 0
    %1192 = vmatpush1.bf16.msra.mxu0 0
    %1193 = vmatprep.subr.bf16.mxu0 0
    %1194 = vmatpush1.bf16.msra.mxu0 0
    %1195 = vmatprep.subr.bf16.mxu0 0
    %1196 = vmatpush1.bf16.msra.mxu0 0
    %1197 = vmatprep.subr.bf16.mxu0 0
    %1198 = vmatpush1.bf16.msra.mxu0 0
    %1199 = vmatprep.subr.bf16.mxu0 0
    %1200 = vmatpush1.bf16.msra.mxu0 0
    %1201 = vmatprep.subr.bf16.mxu0 0
    %1202 = vmatpush1.bf16.msra.mxu0 0
    %1203 = vmatprep.subr.bf16.mxu0 0
    %1204 = vmatpush1.bf16.msra.mxu0 0
    %1205 = vmatprep.subr.bf16.mxu0 0
    %1206 = vmatpush1.bf16.msra.mxu0 0
    %1207 = vmatprep.subr.bf16.mxu0 0
    %1208 = vmatpush1.bf16.msra.mxu0 0
    %1209 = vmatprep.subr.bf16.mxu0 0
    %1210 = vmatpush1.bf16.msra.mxu0 0
    %1211 = vmatprep.mubr.bf16.mxu0 0
    %1212 = vmatmul.mubr.bf16.gmra.mrb[0].mxu0 %v1177
    %v1213 = vpop.f32.mrb[0].mxu0
    %v1214 = vadd.f32 %v139, %v1213
    %v1215 = vpop.f32.mrb[0].mxu0
    %v1216 = vpop.f32.mrb[0].mxu0
    %v1217 = vpop.f32.mrb[0].mxu0
    %1218 = vdwg.mxu0
    %v1219 = vxor.u32 %v1214, 2147483648
    %v1220 = vmul.f32 %v1219, 1.442695
    %v1221 = vpow.pop %v1220
    %v1222 = vadd.f32 %v1221, 1.0
    %v1223 = vrcp.pop %v1222
    %v1224 = vmul.f32 1.0, %v1223
    %v1225 = vtanh.pop %v1214
    %v1226 = vmul.f32 %v1224, %v1043
    %1228 = vrot.lane.b32.xlu0 %v1225, 64
    %v1229 = vpop.permute.xlu0 %1228
    %v1231 = vmul.f32 %v1224, %v1229
    %1233 = vrot.lane.b32.xlu0 %v1231, 32
    %v1234 = vpop.permute.xlu0 %1233
    %v1236 = vadd.f32 %v1226, %v1234
    %v1237 = vtanh.pop %v1236
    %1239 = vrot.lane.b32.xlu0 %v1237, 64
    %v1240 = vpop.permute.xlu0 %1239
    %v1242 = vmul.f32 %v1224, %v1240
    %v1243 = vstv %s1167
    %vm1244 = vcmp.gt.s32.totalorder %v100, %v1243
    %v1245 = vsel %vm1244, 1, 0
    %v1246 = vcvt.s32.f32 %v1245
    %1248 = vset.pattern.permute.xlu0 0
    %1249 = vperm.xlu0 %1248, %v1246
    %v1250 = vpop.permute.xlu0 %1249
    %v1252 = vmul.f32 %v1250, %v1242
    %1254 = vrot.lane.b32.xlu0 %v1252, 32
    %v1255 = vpop.permute.xlu0 %1254
    %v1257 = vadd.f32 %v1064, %v1255
    %s1258 = scalar_lea.vmem [#allocation11], 2
    %v1259 = vld [vmem:[%s1258] sm:$0x1]
    %v1260 = vpack.c.bf16 %v1158, %v1158
    %1262 = vrot.lane.b32.xlu0 %v1260, 64
    %v1263 = vpop.permute.xlu0 %1262
    %v1266 = vsel %vm131, %v1259, %v1263
    %v1267 = vsel %vm165, %v1266, 0
    %1269 = vmatprep.subr.bf16.mxu0 0
    %1270 = vmatpush1.bf16.msra.mxu0 %v282
    %1271 = vmatprep.subr.bf16.mxu0 0
    %1272 = vmatpush1.bf16.msra.mxu0 %v283
    %1273 = vmatprep.subr.bf16.mxu0 0
    %1274 = vmatpush1.bf16.msra.mxu0 %v284
    %1275 = vmatprep.subr.bf16.mxu0 0
    %1276 = vmatpush1.bf16.msra.mxu0 %v285
    %1277 = vmatprep.subr.bf16.mxu0 0
    %1278 = vmatpush1.bf16.msra.mxu0 0
    %1279 = vmatprep.subr.bf16.mxu0 0
    %1280 = vmatpush1.bf16.msra.mxu0 0
    %1281 = vmatprep.subr.bf16.mxu0 0
    %1282 = vmatpush1.bf16.msra.mxu0 0
    %1283 = vmatprep.subr.bf16.mxu0 0
    %1284 = vmatpush1.bf16.msra.mxu0 0
    %1285 = vmatprep.subr.bf16.mxu0 0
    %1286 = vmatpush1.bf16.msra.mxu0 0
    %1287 = vmatprep.subr.bf16.mxu0 0
    %1288 = vmatpush1.bf16.msra.mxu0 0
    %1289 = vmatprep.subr.bf16.mxu0 0
    %1290 = vmatpush1.bf16.msra.mxu0 0
    %1291 = vmatprep.subr.bf16.mxu0 0
    %1292 = vmatpush1.bf16.msra.mxu0 0
    %1293 = vmatprep.subr.bf16.mxu0 0
    %1294 = vmatpush1.bf16.msra.mxu0 0
    %1295 = vmatprep.subr.bf16.mxu0 0
    %1296 = vmatpush1.bf16.msra.mxu0 0
    %1297 = vmatprep.subr.bf16.mxu0 0
    %1298 = vmatpush1.bf16.msra.mxu0 0
    %1299 = vmatprep.subr.bf16.mxu0 0
    %1300 = vmatpush1.bf16.msra.mxu0 0
    %1301 = vmatprep.mubr.bf16.mxu0 0
    %1302 = vmatmul.mubr.bf16.gmra.mrb[0].mxu0 %v1267
    %v1303 = vpop.f32.mrb[0].mxu0
    %v1304 = vadd.f32 %v264, %v1303
    %v1305 = vpop.f32.mrb[0].mxu0
    %v1306 = vpop.f32.mrb[0].mxu0
    %v1307 = vpop.f32.mrb[0].mxu0
    %1308 = vdwg.mxu0
    %v1309 = vxor.u32 %v1304, 2147483648
    %v1310 = vmul.f32 %v1309, 1.442695
    %v1311 = vpow.pop %v1310
    %v1312 = vadd.f32 %v1311, 1.0
    %v1313 = vrcp.pop %v1312
    %v1314 = vmul.f32 1.0, %v1313
    %v1315 = vtanh.pop %v1304
    %v1316 = vmul.f32 %v1314, %v1161
    %1318 = vrot.lane.b32.xlu0 %v1315, 64
    %v1319 = vpop.permute.xlu0 %1318
    %v1321 = vmul.f32 %v1314, %v1319
    %1323 = vrot.lane.b32.xlu0 %v1321, 32
    %v1324 = vpop.permute.xlu0 %1323
    %v1326 = vadd.f32 %v1316, %v1324
    %v1327 = vtanh.pop %v1326
    %1329 = vrot.lane.b32.xlu0 %v1327, 64
    %v1330 = vpop.permute.xlu0 %1329
    %v1332 = vmul.f32 %v1314, %v1330
    %s1333 = ssub.s32 2, %s125
    %v1334 = vstv %s1333
    %vm1335 = vcmp.gt.s32.totalorder %v100, %v1334
    %v1336 = vsel %vm1335, 1, 0
    %v1337 = vcvt.s32.f32 %v1336
    %1339 = vset.pattern.permute.xlu0 0
    %1340 = vperm.xlu0 %1339, %v1337
    %v1341 = vpop.permute.xlu0 %1340
    %v1343 = vmul.f32 %v1341, %v1332
    %v1344 = vsub.f32 1.0, %v1337
    %1346 = vset.pattern.permute.xlu0 0
    %1347 = vperm.xlu0 %1346, %v1344
    %v1348 = vpop.permute.xlu0 %1347
    %v1350 = vmul.f32 %v1348, %v1158
    %v1351 = vadd.f32 %v1343, %v1350
    %v1352 = vmul.f32 %v1341, %v1326
    %v1353 = vmul.f32 %v1348, %v1161
    %v1354 = vadd.f32 %v1352, %v1353
    %1356 = vrot.lane.b32.xlu0 %v1343, 32
    %v1357 = vpop.permute.xlu0 %1356
    %v1359 = vadd.f32 %v1166, %v1357
    %s1360 = sadd.s32 %s125, 6
    %s1361 = scalar_lea.vmem [#allocation8], 6
    %v1362 = vld [vmem:[%s1361] sm:$0x1]
    %v1363 = vpack.c.bf16 %v1242, %v1242
    %1365 = vrot.lane.b32.xlu0 %v1363, 64
    %v1366 = vpop.permute.xlu0 %1365
    %v1369 = vsel %vm131, %v1362, %v1366
    %v1370 = vsel %vm165, %v1369, 0
    %1372 = vmatprep.subr.bf16.mxu0 0
    %1373 = vmatpush1.bf16.msra.mxu0 %v157
    %1374 = vmatprep.subr.bf16.mxu0 0
    %1375 = vmatpush1.bf16.msra.mxu0 %v158
    %1376 = vmatprep.subr.bf16.mxu0 0
    %1377 = vmatpush1.bf16.msra.mxu0 %v159
    %1378 = vmatprep.subr.bf16.mxu0 0
    %1379 = vmatpush1.bf16.msra.mxu0 %v160
    %1380 = vmatprep.subr.bf16.mxu0 0
    %1381 = vmatpush1.bf16.msra.mxu0 0
    %1382 = vmatprep.subr.bf16.mxu0 0
    %1383 = vmatpush1.bf16.msra.mxu0 0
    %1384 = vmatprep.subr.bf16.mxu0 0
    %1385 = vmatpush1.bf16.msra.mxu0 0
    %1386 = vmatprep.subr.bf16.mxu0 0
    %1387 = vmatpush1.bf16.msra.mxu0 0
    %1388 = vmatprep.subr.bf16.mxu0 0
    %1389 = vmatpush1.bf16.msra.mxu0 0
    %1390 = vmatprep.subr.bf16.mxu0 0
    %1391 = vmatpush1.bf16.msra.mxu0 0
    %1392 = vmatprep.subr.bf16.mxu0 0
    %1393 = vmatpush1.bf16.msra.mxu0 0
    %1394 = vmatprep.subr.bf16.mxu0 0
    %1395 = vmatpush1.bf16.msra.mxu0 0
    %1396 = vmatprep.subr.bf16.mxu0 0
    %1397 = vmatpush1.bf16.msra.mxu0 0
    %1398 = vmatprep.subr.bf16.mxu0 0
    %1399 = vmatpush1.bf16.msra.mxu0 0
    %1400 = vmatprep.subr.bf16.mxu0 0
    %1401 = vmatpush1.bf16.msra.mxu0 0
    %1402 = vmatprep.subr.bf16.mxu0 0
    %1403 = vmatpush1.bf16.msra.mxu0 0
    %1404 = vmatprep.mubr.bf16.mxu0 0
    %1405 = vmatmul.mubr.bf16.gmra.mrb[0].mxu0 %v1370
    %v1406 = vpop.f32.mrb[0].mxu0
    %v1407 = vadd.f32 %v139, %v1406
    %v1408 = vpop.f32.mrb[0].mxu0
    %v1409 = vpop.f32.mrb[0].mxu0
    %v1410 = vpop.f32.mrb[0].mxu0
    %1411 = vdwg.mxu0
    %v1412 = vxor.u32 %v1407, 2147483648
    %v1413 = vmul.f32 %v1412, 1.442695
    %v1414 = vpow.pop %v1413
    %v1415 = vadd.f32 %v1414, 1.0
    %v1416 = vrcp.pop %v1415
    %v1417 = vmul.f32 1.0, %v1416
    %v1418 = vtanh.pop %v1407
    %v1419 = vmul.f32 %v1417, %v1236
    %1421 = vrot.lane.b32.xlu0 %v1418, 64
    %v1422 = vpop.permute.xlu0 %1421
    %v1424 = vmul.f32 %v1417, %v1422
    %1426 = vrot.lane.b32.xlu0 %v1424, 32
    %v1427 = vpop.permute.xlu0 %1426
    %v1429 = vadd.f32 %v1419, %v1427
    %v1430 = vtanh.pop %v1429
    %1432 = vrot.lane.b32.xlu0 %v1430, 64
    %v1433 = vpop.permute.xlu0 %1432
    %v1435 = vmul.f32 %v1417, %v1433
    %v1436 = vstv %s1360
    %vm1437 = vcmp.gt.s32.totalorder %v100, %v1436
    %v1438 = vsel %vm1437, 1, 0
    %v1439 = vcvt.s32.f32 %v1438
    %1441 = vset.pattern.permute.xlu0 0
    %1442 = vperm.xlu0 %1441, %v1439
    %v1443 = vpop.permute.xlu0 %1442
    %v1445 = vmul.f32 %v1443, %v1435
    %1447 = vrot.lane.b32.xlu0 %v1445, 32
    %v1448 = vpop.permute.xlu0 %1447
    %v1450 = vadd.f32 %v1257, %v1448
    %s1451 = scalar_lea.vmem [#allocation11], 1
    %v1452 = vld [vmem:[%s1451] sm:$0x1]
    %v1453 = vpack.c.bf16 %v1351, %v1351
    %1455 = vrot.lane.b32.xlu0 %v1453, 64
    %v1456 = vpop.permute.xlu0 %1455
    %v1459 = vsel %vm131, %v1452, %v1456
    %v1460 = vsel %vm165, %v1459, 0
    %1462 = vmatprep.subr.bf16.mxu0 0
    %1463 = vmatpush1.bf16.msra.mxu0 %v282
    %1464 = vmatprep.subr.bf16.mxu0 0
    %1465 = vmatpush1.bf16.msra.mxu0 %v283
    %1466 = vmatprep.subr.bf16.mxu0 0
    %1467 = vmatpush1.bf16.msra.mxu0 %v284
    %1468 = vmatprep.subr.bf16.mxu0 0
    %1469 = vmatpush1.bf16.msra.mxu0 %v285
    %1470 = vmatprep.subr.bf16.mxu0 0
    %1471 = vmatpush1.bf16.msra.mxu0 0
    %1472 = vmatprep.subr.bf16.mxu0 0
    %1473 = vmatpush1.bf16.msra.mxu0 0
    %1474 = vmatprep.subr.bf16.mxu0 0
    %1475 = vmatpush1.bf16.msra.mxu0 0
    %1476 = vmatprep.subr.bf16.mxu0 0
    %1477 = vmatpush1.bf16.msra.mxu0 0
    %1478 = vmatprep.subr.bf16.mxu0 0
    %1479 = vmatpush1.bf16.msra.mxu0 0
    %1480 = vmatprep.subr.bf16.mxu0 0
    %1481 = vmatpush1.bf16.msra.mxu0 0
    %1482 = vmatprep.subr.bf16.mxu0 0
    %1483 = vmatpush1.bf16.msra.mxu0 0
    %1484 = vmatprep.subr.bf16.mxu0 0
    %1485 = vmatpush1.bf16.msra.mxu0 0
    %1486 = vmatprep.subr.bf16.mxu0 0
    %1487 = vmatpush1.bf16.msra.mxu0 0
    %1488 = vmatprep.subr.bf16.mxu0 0
    %1489 = vmatpush1.bf16.msra.mxu0 0
    %1490 = vmatprep.subr.bf16.mxu0 0
    %1491 = vmatpush1.bf16.msra.mxu0 0
    %1492 = vmatprep.subr.bf16.mxu0 0
    %1493 = vmatpush1.bf16.msra.mxu0 0
    %1494 = vmatprep.mubr.bf16.mxu0 0
    %1495 = vmatmul.mubr.bf16.gmra.mrb[0].mxu0 %v1460
    %v1496 = vpop.f32.mrb[0].mxu0
    %v1497 = vadd.f32 %v264, %v1496
    %v1498 = vpop.f32.mrb[0].mxu0
    %v1499 = vpop.f32.mrb[0].mxu0
    %v1500 = vpop.f32.mrb[0].mxu0
    %1501 = vdwg.mxu0
    %v1502 = vxor.u32 %v1497, 2147483648
    %v1503 = vmul.f32 %v1502, 1.442695
    %v1504 = vpow.pop %v1503
    %v1505 = vadd.f32 %v1504, 1.0
    %v1506 = vrcp.pop %v1505
    %v1507 = vmul.f32 1.0, %v1506
    %v1508 = vtanh.pop %v1497
    %v1509 = vmul.f32 %v1507, %v1354
    %1511 = vrot.lane.b32.xlu0 %v1508, 64
    %v1512 = vpop.permute.xlu0 %1511
    %v1514 = vmul.f32 %v1507, %v1512
    %1516 = vrot.lane.b32.xlu0 %v1514, 32
    %v1517 = vpop.permute.xlu0 %1516
    %v1519 = vadd.f32 %v1509, %v1517
    %v1520 = vtanh.pop %v1519
    %1522 = vrot.lane.b32.xlu0 %v1520, 64
    %v1523 = vpop.permute.xlu0 %1522
    %v1525 = vmul.f32 %v1507, %v1523
    %s1526 = ssub.s32 1, %s125
    %v1527 = vstv %s1526
    %vm1528 = vcmp.gt.s32.totalorder %v100, %v1527
    %v1529 = vsel %vm1528, 1, 0
    %v1530 = vcvt.s32.f32 %v1529
    %1532 = vset.pattern.permute.xlu0 0
    %1533 = vperm.xlu0 %1532, %v1530
    %v1534 = vpop.permute.xlu0 %1533
    %v1536 = vmul.f32 %v1534, %v1525
    %v1537 = vsub.f32 1.0, %v1530
    %1539 = vset.pattern.permute.xlu0 0
    %1540 = vperm.xlu0 %1539, %v1537
    %v1541 = vpop.permute.xlu0 %1540
    %v1543 = vmul.f32 %v1541, %v1351
    %v1544 = vadd.f32 %v1536, %v1543
    %v1545 = vmul.f32 %v1534, %v1519
    %v1546 = vmul.f32 %v1541, %v1354
    %v1547 = vadd.f32 %v1545, %v1546
    %1549 = vrot.lane.b32.xlu0 %v1536, 32
    %v1550 = vpop.permute.xlu0 %1549
    %v1552 = vadd.f32 %v1359, %v1550
    %s1553 = sadd.s32 %s125, 7
    %s1554 = scalar_lea.vmem [#allocation8], 7
    %v1555 = vld [vmem:[%s1554] sm:$0x1]
    %v1556 = vpack.c.bf16 %v1435, %v1435
    %1558 = vrot.lane.b32.xlu0 %v1556, 64
    %v1559 = vpop.permute.xlu0 %1558
    %v1562 = vsel %vm131, %v1555, %v1559
    %v1563 = vsel %vm165, %v1562, 0
    %1565 = vmatprep.subr.bf16.mxu0 0
    %1566 = vmatpush1.bf16.msra.mxu0 %v157
    %1567 = vmatprep.subr.bf16.mxu0 0
    %1568 = vmatpush1.bf16.msra.mxu0 %v158
    %1569 = vmatprep.subr.bf16.mxu0 0
    %1570 = vmatpush1.bf16.msra.mxu0 %v159
    %1571 = vmatprep.subr.bf16.mxu0 0
    %1572 = vmatpush1.bf16.msra.mxu0 %v160
    %1573 = vmatprep.subr.bf16.mxu0 0
    %1574 = vmatpush1.bf16.msra.mxu0 0
    %1575 = vmatprep.subr.bf16.mxu0 0
    %1576 = vmatpush1.bf16.msra.mxu0 0
    %1577 = vmatprep.subr.bf16.mxu0 0
    %1578 = vmatpush1.bf16.msra.mxu0 0
    %1579 = vmatprep.subr.bf16.mxu0 0
    %1580 = vmatpush1.bf16.msra.mxu0 0
    %1581 = vmatprep.subr.bf16.mxu0 0
    %1582 = vmatpush1.bf16.msra.mxu0 0
    %1583 = vmatprep.subr.bf16.mxu0 0
    %1584 = vmatpush1.bf16.msra.mxu0 0
    %1585 = vmatprep.subr.bf16.mxu0 0
    %1586 = vmatpush1.bf16.msra.mxu0 0
    %1587 = vmatprep.subr.bf16.mxu0 0
    %1588 = vmatpush1.bf16.msra.mxu0 0
    %1589 = vmatprep.subr.bf16.mxu0 0
    %1590 = vmatpush1.bf16.msra.mxu0 0
    %1591 = vmatprep.subr.bf16.mxu0 0
    %1592 = vmatpush1.bf16.msra.mxu0 0
    %1593 = vmatprep.subr.bf16.mxu0 0
    %1594 = vmatpush1.bf16.msra.mxu0 0
    %1595 = vmatprep.subr.bf16.mxu0 0
    %1596 = vmatpush1.bf16.msra.mxu0 0
    %1597 = vmatprep.mubr.bf16.mxu0 0
    %1598 = vmatmul.mubr.bf16.gmra.mrb[0].mxu0 %v1563
    %v1599 = vpop.f32.mrb[0].mxu0
    %v1600 = vadd.f32 %v139, %v1599
    %v1601 = vpop.f32.mrb[0].mxu0
    %v1602 = vpop.f32.mrb[0].mxu0
    %v1603 = vpop.f32.mrb[0].mxu0
    %1604 = vdwg.mxu0
    %v1605 = vxor.u32 %v1600, 2147483648
    %v1606 = vmul.f32 %v1605, 1.442695
    %v1607 = vpow.pop %v1606
    %v1608 = vadd.f32 %v1607, 1.0
    %v1609 = vrcp.pop %v1608
    %v1610 = vmul.f32 1.0, %v1609
    %v1611 = vtanh.pop %v1600
    %v1612 = vmul.f32 %v1610, %v1429
    %1614 = vrot.lane.b32.xlu0 %v1611, 64
    %v1615 = vpop.permute.xlu0 %1614
    %v1617 = vmul.f32 %v1610, %v1615
    %1619 = vrot.lane.b32.xlu0 %v1617, 32
    %v1620 = vpop.permute.xlu0 %1619
    %v1622 = vadd.f32 %v1612, %v1620
    %v1623 = vtanh.pop %v1622
    %1625 = vrot.lane.b32.xlu0 %v1623, 64
    %v1626 = vpop.permute.xlu0 %1625
    %v1628 = vmul.f32 %v1610, %v1626
    %v1629 = vstv %s1553
    %vm1630 = vcmp.gt.s32.totalorder %v100, %v1629
    %v1631 = vsel %vm1630, 1, 0
    %v1632 = vcvt.s32.f32 %v1631
    %1634 = vset.pattern.permute.xlu0 0
    %1635 = vperm.xlu0 %1634, %v1632
    %v1636 = vpop.permute.xlu0 %1635
    %v1638 = vmul.f32 %v1636, %v1628
    %1640 = vrot.lane.b32.xlu0 %v1638, 32
    %v1641 = vpop.permute.xlu0 %1640
    %v1643 = vadd.f32 %v1450, %v1641
    %v1644 = vld [vmem:[#allocation11] sm:$0x1]
    %v1645 = vpack.c.bf16 %v1544, %v1544
    %1647 = vrot.lane.b32.xlu0 %v1645, 64
    %v1648 = vpop.permute.xlu0 %1647
    %v1651 = vsel %vm131, %v1644, %v1648
    %v1652 = vsel %vm165, %v1651, 0
    %1654 = vmatprep.subr.bf16.mxu0 0
    %1655 = vmatpush1.bf16.msra.mxu0 %v282
    %1656 = vmatprep.subr.bf16.mxu0 0
    %1657 = vmatpush1.bf16.msra.mxu0 %v283
    %1658 = vmatprep.subr.bf16.mxu0 0
    %1659 = vmatpush1.bf16.msra.mxu0 %v284
    %1660 = vmatprep.subr.bf16.mxu0 0
    %1661 = vmatpush1.bf16.msra.mxu0 %v285
    %1662 = vmatprep.subr.bf16.mxu0 0
    %1663 = vmatpush1.bf16.msra.mxu0 0
    %1664 = vmatprep.subr.bf16.mxu0 0
    %1665 = vmatpush1.bf16.msra.mxu0 0
    %1666 = vmatprep.subr.bf16.mxu0 0
    %1667 = vmatpush1.bf16.msra.mxu0 0
    %1668 = vmatprep.subr.bf16.mxu0 0
    %1669 = vmatpush1.bf16.msra.mxu0 0
    %1670 = vmatprep.subr.bf16.mxu0 0
    %1671 = vmatpush1.bf16.msra.mxu0 0
    %1672 = vmatprep.subr.bf16.mxu0 0
    %1673 = vmatpush1.bf16.msra.mxu0 0
    %1674 = vmatprep.subr.bf16.mxu0 0
    %1675 = vmatpush1.bf16.msra.mxu0 0
    %1676 = vmatprep.subr.bf16.mxu0 0
    %1677 = vmatpush1.bf16.msra.mxu0 0
    %1678 = vmatprep.subr.bf16.mxu0 0
    %1679 = vmatpush1.bf16.msra.mxu0 0
    %1680 = vmatprep.subr.bf16.mxu0 0
    %1681 = vmatpush1.bf16.msra.mxu0 0
    %1682 = vmatprep.subr.bf16.mxu0 0
    %1683 = vmatpush1.bf16.msra.mxu0 0
    %1684 = vmatprep.subr.bf16.mxu0 0
    %1685 = vmatpush1.bf16.msra.mxu0 0
    %1686 = vmatprep.mubr.bf16.mxu0 0
    %1687 = vmatmul.mubr.bf16.gmra.mrb[0].mxu0 %v1652
    %v1688 = vpop.f32.mrb[0].mxu0
    %v1689 = vadd.f32 %v264, %v1688
    %v1690 = vpop.f32.mrb[0].mxu0
    %v1691 = vpop.f32.mrb[0].mxu0
    %v1692 = vpop.f32.mrb[0].mxu0
    %1693 = vdwg.mxu0
    %v1694 = vxor.u32 %v1689, 2147483648
    %v1695 = vmul.f32 %v1694, 1.442695
    %v1696 = vpow.pop %v1695
    %v1697 = vadd.f32 %v1696, 1.0
    %v1698 = vrcp.pop %v1697
    %v1699 = vmul.f32 1.0, %v1698
    %v1700 = vtanh.pop %v1689
    %v1701 = vmul.f32 %v1699, %v1547
    %1703 = vrot.lane.b32.xlu0 %v1700, 64
    %v1704 = vpop.permute.xlu0 %1703
    %v1706 = vmul.f32 %v1699, %v1704
    %1708 = vrot.lane.b32.xlu0 %v1706, 32
    %v1709 = vpop.permute.xlu0 %1708
    %v1711 = vadd.f32 %v1701, %v1709
    %v1712 = vtanh.pop %v1711
    %1714 = vrot.lane.b32.xlu0 %v1712, 64
    %v1715 = vpop.permute.xlu0 %1714
    %v1717 = vmul.f32 %v1699, %v1715
    %s1718 = ssub.s32 0, %s125
    %v1719 = vstv %s1718
    %vm1720 = vcmp.gt.s32.totalorder %v100, %v1719
    %v1721 = vsel %vm1720, 1, 0
    %v1722 = vcvt.s32.f32 %v1721
    %1724 = vset.pattern.permute.xlu0 0
    %1725 = vperm.xlu0 %1724, %v1722
    %v1726 = vpop.permute.xlu0 %1725
    %v1728 = vmul.f32 %v1726, %v1717
    %v1729 = vsub.f32 1.0, %v1722
    %1731 = vset.pattern.permute.xlu0 0
    %1732 = vperm.xlu0 %1731, %v1729
    %v1733 = vpop.permute.xlu0 %1732
    %v1735 = vmul.f32 %v1733, %v1544
    %v1736 = vadd.f32 %v1728, %v1735
    %v1737 = vmul.f32 %v1726, %v1711
    %v1738 = vmul.f32 %v1733, %v1547
    %v1739 = vadd.f32 %v1737, %v1738
    %1741 = vrot.lane.b32.xlu0 %v1728, 32
    %v1742 = vpop.permute.xlu0 %1741
    %v1744 = vadd.f32 %v1552, %v1742
    %1746 = vrot.lane.b32.xlu0 %v1628, 32
    %v1747 = vpop.permute.xlu0 %1746
    %vm1749 = vcmask 254976
    %1750 = vst.msk [vmem:[#allocation2] sm:$0x3] %vm1749, %v1747
    %1752 = vrot.lane.b32.xlu0 %v1622, 96
    %v1753 = vpop.permute.xlu0 %1752
    %1755 = vst.msk [vmem:[#allocation3] sm:$0x3] %vm1749, %v1753
    %1757 = vrot.lane.b32.xlu0 %v1736, 32
    %v1758 = vpop.permute.xlu0 %1757
    %1760 = vst.msk [vmem:[#allocation4] sm:$0x3] %vm1749, %v1758
    %1762 = vrot.lane.b32.xlu0 %v1739, 96
    %v1763 = vpop.permute.xlu0 %1762
    %1765 = vst.msk [vmem:[#allocation5] sm:$0x3] %vm1749, %v1763
    %1766 = vst.msk [vmem:[#allocation6] sm:$0x3] %vm1749, %v1643
    %1767 = vst.msk [vmem:[#allocation7] sm:$0x3] %vm1749, %v1744
    // Predicated region
    $region50: #{tpu_custom_call.1} parent=1 // pred_check
      %p1768 = pneg %p89
    $region51: #{tpu_custom_call.1} parent=1 // pred_check_branch
      %1770 = sbr.rel (%p1768) target = $region53
    $region52: #{tpu_custom_call.1} parent=1 // pred_region
      %v1771 = vld [vmem:[#allocation6] sm:$0x3]
      %v1772 = vld [vmem:[#allocation7] sm:$0x3]
      %1774 = vrot.lane.b32.xlu0 %v1772, 32
      %v1775 = vpop.permute.xlu0 %1774
      %v1777 = vsel %vm131, %v1771, %v1775
      %vm1778 = vcmask 517120
      %1779 = vst.msk [vmem:[#allocation16] sm:$0x3] %vm1778, %v1777
    $region53: #{tpu_custom_call.1} parent=1 // pred_fallthru
      _
    // Predicated region
    $region54: #{tpu_custom_call.1} parent=1 // pred_check
      _
    $region55: #{tpu_custom_call.1} parent=1 // pred_check_branch
      %1781 = sbr.rel (0) target = $region57
    $region56: #{tpu_custom_call.1} parent=1 // pred_region
      %s1783 = ssub.s32 32, 32
      %1784 = vsyncadd [#allocation10], %s1783
      %s1786 = sshll.u32 [#allocation16], 4
      %s1787 = int_to_ptr.vmem [resolvable:$true] %s1786
      %1789 = dma.vmem_to_hbm [thread:$0]  %s1787, 32, %s7, [#allocation10]
    $region57: #{tpu_custom_call.1} parent=1 // pred_fallthru
      _
    // Predicated region
    $region58: #{tpu_custom_call.1} parent=1 // pred_check
      _
    $region59: #{tpu_custom_call.1} parent=1 // pred_check_branch
      %1791 = sbr.rel (0) target = $region61
    $region60: #{tpu_custom_call.1} parent=1 // pred_region
      %1792 = dma.done [#allocation10], 32
    $region61: #{tpu_custom_call.1} parent=1 // pred_fallthru
      _
    %1793 = vsyncpa [#allocation9], 1
    %1794 = vsyncpa [#allocation12], 1
    %1795 = vsyncpa [#allocation15], 1
    %1796 = vsyncpa [#allocation10], 1

</llo_original>
